<compile_context>
chip_gen: v6e
topology: v6e:2x2x1
jax: 0.10.0
libtpu: 0.0.40
codegen_flags: <defaults>
</compile_context>

<pallas_src>
import jax
import jax.numpy as jnp
from jax import lax
from jax.experimental import pallas as pl
from jax.experimental.pallas import tpu as pltpu


_NBINS = 256
_MAX_CHUNK = 8192          # 64 lane-dense vregs per pixel chunk


def _iota_f32(shape, dim):
    return lax.broadcasted_iota(jnp.int32, shape, dim).astype(jnp.float32)


def _floor_div_exact(num, den):
    """Exact floor(num/den) for non-negative exact-integer-valued f32 arrays."""
    q = jnp.floor(num / den)
    r = num - q * den
    q = q + (r >= den).astype(num.dtype)
    q = q - (r < 0.0).astype(num.dtype)
    return q


def _round_up(x, m):
    return ((x + m - 1) // m) * m


def _chunking(hw, max_chunk=_MAX_CHUNK):
    """Lane-dense, 128-aligned pixel chunking (robust to any H*W)."""
    chunk = min(max_chunk, _round_up(hw, 128))
    hw_pad = _round_up(hw, chunk)
    return chunk, hw_pad, hw_pad // chunk


# ----------------------------------------------------------------------------
# Pass 1: per-channel histogram (MXU reduction) + PIL-equalize LUT.
#   grid = (C [parallel], n_chunks [arbitrary]); histogram accumulated in a
#   (256,1) f32 VMEM scratch, LUT emitted only at the last chunk.
# ----------------------------------------------------------------------------
def _hist_lut_kernel(x_ref, lut_ref, hist_acc):
    t = pl.program_id(1)

    @pl.when(t == 0)
    def _():
        hist_acc[...] = jnp.zeros_like(hist_acc)

    x = x_ref[0, 0]                                    # (1, CHUNK) f32, integer valued 0..255 (256 = pad)
    bins_col = _iota_f32((_NBINS, 1), 0)               # (256, 1)
    onehot = (x == bins_col).astype(jnp.bfloat16)      # (256, CHUNK): bins on sublanes, pixels on lanes
    ones_col = jnp.ones((x.shape[1], 1), dtype=jnp.bfloat16)
    # Histogram reduction on the MXU (bf16 operands, exact f32 accumulation).
    hist_acc[...] += jnp.dot(onehot, ones_col, preferred_element_type=jnp.float32)  # (256, 1)

    @pl.when(t == pl.num_programs(1) - 1)
    def _():
        hist = hist_acc[...]                           # (256, 1) exact integer counts
        bins = _iota_f32((_NBINS, 1), 0)

        # step = (num_pixels - count(last nonzero bin)) // 255  (PIL semantics)
        nonzero = hist > 0.0
        last_bin = jnp.max(jnp.where(nonzero, bins, -1.0), axis=0, keepdims=True)      # (1,1)
        cnt_last = jnp.sum(jnp.where(bins == last_bin, hist, 0.0), axis=0, keepdims=True)
        total = jnp.sum(hist, axis=0, keepdims=True)
        step = _floor_div_exact(total - cnt_last, jnp.full((1, 1), 255.0, jnp.float32))

        # exclusive cumsum via strict-lower-triangular matmul (kept in f32: counts
        # exceed bf16's exact-integer range).
        row = _iota_f32((_NBINS, _NBINS), 0)
        col = _iota_f32((_NBINS, _NBINS), 1)
        strict_lower = (col < row).astype(jnp.float32)  # M[j,k] = 1 iff k < j
        excl_cum = jnp.dot(strict_lower, hist, preferred_element_type=jnp.float32)      # (256,1)

        # lut[i] = clamp((excl_cum[i] + step//2) // step, 0, 255), exact integer math.
        den = jnp.maximum(step, 1.0)
        q = _floor_div_exact(excl_cum + jnp.floor(step * 0.5), den)
        lut = jnp.clip(q, 0.0, 255.0)
        lut = jnp.where(step >= 1.0, lut, bins)        # identity LUT when step == 0
        lut_ref[0] = lut


# ----------------------------------------------------------------------------
# Pass 2: fused LUT apply (bf16 one-hot matmul) + to_tensor scaling (/255).
#   Reads the image exactly once, writes the final lane-dense float tensor.
# ----------------------------------------------------------------------------
def _apply_lut_kernel(lut_ref, x_ref, o_ref):
    x = x_ref[0, 0]                                    # (1, CHUNK)
    bins_col = _iota_f32((_NBINS, 1), 0)
    onehot = (x == bins_col).astype(jnp.bfloat16)      # (256, CHUNK); padded pixels -> all-zero column
    lut = lut_ref[0].astype(jnp.bfloat16)              # (1, 256); 0..255 exact in bf16
    y = jnp.dot(lut, onehot, preferred_element_type=jnp.float32)   # (1, CHUNK) lane-dense
    o_ref[0, 0] = y * (1.0 / 255.0)


def equalize_and_to_tensor(img_chw):
    c, h, w = img_chw.shape
    hw = h * w
    chunk, hw_pad, nt = _chunking(hw)

    x = img_chw.reshape(c, hw)
    if hw_pad != hw:
        # Out-of-range sentinel: never matches a bin (no histogram hit, zero output).
        x = jnp.pad(x, ((0, 0), (0, hw_pad - hw)), constant_values=float(_NBINS))
    x4 = x.reshape(c, nt, 1, chunk)                    # free XLA reshape; blocks are (1, CHUNK)

    lut = pl.pallas_call(
        _hist_lut_kernel,
        out_shape=jax.ShapeDtypeStruct((c, _NBINS, 1), jnp.float32),
        grid_spec=pltpu.PrefetchScalarGridSpec(
            num_scalar_prefetch=0,
            grid=(c, nt),
            in_specs=[pl.BlockSpec((1, 1, 1, chunk), lambda ci, t: (ci, t, 0, 0))],
            out_specs=pl.BlockSpec((1, _NBINS, 1), lambda ci, t: (ci, 0, 0)),
            scratch_shapes=[pltpu.VMEM((_NBINS, 1), jnp.float32)],
        ),
        compiler_params=pltpu.CompilerParams(
            dimension_semantics=("parallel", "arbitrary")),
    )(x4)

    lut_row = lut.reshape(c, 1, _NBINS)                # (256,1) -> (1,256) per channel, tiny & free

    y4 = pl.pallas_call(
        _apply_lut_kernel,
        out_shape=jax.ShapeDtypeStruct((c, nt, 1, chunk), jnp.float32),
        grid_spec=pltpu.PrefetchScalarGridSpec(
            num_scalar_prefetch=0,
            grid=(c, nt),
            in_specs=[
                pl.BlockSpec((1, 1, _NBINS), lambda ci, t: (ci, 0, 0)),
                pl.BlockSpec((1, 1, 1, chunk), lambda ci, t: (ci, t, 0, 0)),
            ],
            out_specs=pl.BlockSpec((1, 1, 1, chunk), lambda ci, t: (ci, t, 0, 0)),
        ),
        compiler_params=pltpu.CompilerParams(
            dimension_semantics=("parallel", "parallel")),
    )(lut_row, x4)

    y = y4.reshape(c, hw_pad)[:, :hw].reshape(c, h, w)
    return y


# ----------------------------------------------------------------------------
# _target_to_tensor: overlay masks sequentially (later masks win) on a
# lane-dense flattened int32 accumulator.
#   grid = (n_chunks [parallel], n_masks [arbitrary]).
# ----------------------------------------------------------------------------
def _target_kernel(cls_ref, mask_ref, o_ref):
    i = pl.program_id(1)

    @pl.when(i == 0)
    def _():
        o_ref[...] = jnp.zeros_like(o_ref)

    m = mask_ref[0, 0]                                 # (1, CHUNK) f32 in [0, 1]
    o_ref[0] = jnp.where(m >= 0.5, cls_ref[i], o_ref[0])


def build_target(class_indices, masks, image_size):
    n, h, w = masks.shape
    hw = h * w
    chunk, hw_pad, nt = _chunking(hw)

    mflat = masks.reshape(n, hw)
    if hw_pad != hw:
        mflat = jnp.pad(mflat, ((0, 0), (0, hw_pad - hw)), constant_values=0.0)
    m4 = mflat.reshape(n, nt, 1, chunk)

    tgt = pl.pallas_call(
        _target_kernel,
        out_shape=jax.ShapeDtypeStruct((nt, 1, chunk), jnp.int32),
        grid_spec=pltpu.PrefetchScalarGridSpec(
            num_scalar_prefetch=1,
            grid=(nt, n),
            in_specs=[pl.BlockSpec((1, 1, 1, chunk), lambda ti, i, cls: (i, ti, 0, 0))],
            out_specs=pl.BlockSpec((1, 1, chunk), lambda ti, i, cls: (ti, 0, 0)),
        ),
        compiler_params=pltpu.CompilerParams(
            dimension_semantics=("parallel", "arbitrary")),
    )(class_indices, m4)

    return tgt.reshape(hw_pad)[:hw].reshape(h, w)


# ----------------------------------------------------------------------------
# Forward wrapper (mirrors SemanticSegmentationTrainingTransforms.forward)
# ----------------------------------------------------------------------------
def semantic_segmentation_training_transforms(image_u8_hwc, masks, class_indices,
                                              image_size, key):
    h, w = image_size

    # Single device round-trip for both Bernoulli decisions.
    r = jax.device_get(jax.random.uniform(key, (2,)))
    do_scale_translation = bool(r[0] < 0.25)
    do_hflip = bool(r[1] < 0.5)
    _ = do_scale_translation  # TODO(synk): _random_scale_translation branch not implemented.

    # Resize branch (transforms.Resize(image_size), bilinear) — plain-JAX glue.
    img = image_u8_hwc.astype(jnp.float32)
    img = jax.image.resize(img, (h, w, 3), method="bilinear")
    img = jnp.clip(jnp.round(img), 0.0, 255.0)         # emulate PIL uint8 values
    img_chw = jnp.transpose(img, (2, 0, 1))            # (3, H, W)

    n_masks = masks.shape[0]
    masks_r = jax.image.resize(masks.astype(jnp.float32), (n_masks, h, w),
                               method="bilinear")
    masks_r = jnp.clip(masks_r, 0.0, 1.0)

    # F.hflip specialized at trace time (static bool): pure lane reversal done
    # once on the image here and once on the final label map below; it commutes
    # with equalize (per-pixel LUT of a permutation-invariant histogram) and
    # with the per-pixel mask composition.
    if do_hflip:
        img_chw = img_chw[:, :, ::-1]

    # F.equalize + F.to_tensor, fused two-pass Pallas pipeline.
    image_tensor = equalize_and_to_tensor(img_chw)     # (3, H, W) float32 in [0, 1]

    # _target_to_tensor (int32 on TPU instead of PyTorch int64).
    target_tensor = build_target(class_indices.astype(jnp.int32), masks_r, image_size)
    if do_hflip:
        target_tensor = target_tensor[:, ::-1]

    return image_tensor, target_tensor, {}


if __name__ == "__main__":
    key = jax.random.PRNGKey(0)
    k_img, k_mask, k_rand = jax.random.split(key, 3)

    image_size = (16, 16)
    # raw "PIL-like" HWC uint8 image at a different input resolution
    image = jax.random.randint(k_img, (20, 24, 3), 0, 256, dtype=jnp.int32).astype(jnp.uint8)
    # binary masks (mode '1' approximated as {0,1} float) + class indices
    masks = (jax.random.uniform(k_mask, (3, 20, 24)) > 0.7).astype(jnp.float32)
    class_indices = jnp.array([1, 2, 3], dtype=jnp.int32)

    image_tensor, target_tensor, extra = semantic_segmentation_training_transforms(
        image, masks, class_indices, image_size, k_rand)
    jax.block_until_ready((image_tensor, target_tensor))

    assert image_tensor.shape == (3, 16, 16) and image_tensor.dtype == jnp.float32
    assert target_tensor.shape == (16, 16) and target_tensor.dtype == jnp.int32
    assert float(jnp.min(image_tensor)) >= 0.0 and float(jnp.max(image_tensor)) <= 1.0
    assert extra == {}
    print("KERNEL_OK")
</pallas_src>

<mosaic_0001>
module attributes {stable_mosaic.version = 11 : i64} {
  func.func @_hist_lut_kernel(%arg0: i32, %arg1: i32, %arg2: memref<1x1x1x256xf32, #tpu.memory_space<vmem>>, %arg3: memref<1x256x1xf32, #tpu.memory_space<vmem>>, %arg4: memref<256x1xf32, #tpu.memory_space<vmem>>) attributes {dimension_semantics = [#tpu.dimension_semantics<parallel>, #tpu.dimension_semantics<arbitrary>], iteration_bounds = array<i64: 3, 1>, scalar_prefetch = 0 : i64, scratch_operands = 1 : i64, tpu.core_type = #tpu.core_type<tc>, window_params = [{transform_indices = @transform_0, window_bounds = array<i64: 1, 1, 1, 256>}, {transform_indices = @transform_1, window_bounds = array<i64: 1, 256, 1>}]} {
    %c0_i32 = arith.constant 0 : i32
    %0 = arith.cmpi eq, %arg1, %c0_i32 : i32
    %1 = arith.extui %0 : i1 to i32
    %c0_i32_0 = arith.constant 0 : i32
    %2 = arith.cmpi ne, %1, %c0_i32_0 : i32
    scf.if %2 {
      %cst_11 = arith.constant 0.000000e+00 : f32
      %21 = vector.broadcast %cst_11 : f32 to vector<256x1xf32>
      %c0_12 = arith.constant 0 : index
      %c0_13 = arith.constant 0 : index
      %22 = vector.load %arg4[%c0_12, %c0_13] : memref<256x1xf32, #tpu.memory_space<vmem>>, vector<256x1xf32>
      tpu.vector_store %arg4[%c0_12, %c0_13], %21 {strides = array<i32>} : memref<256x1xf32, #tpu.memory_space<vmem>>, vector<256x1xf32>,
    } else {
    }
    %c0 = arith.constant 0 : index
    %c0_1 = arith.constant 0 : index
    %c0_2 = arith.constant 0 : index
    %c0_3 = arith.constant 0 : index
    %3 = vector.load %arg2[%c0, %c0_1, %c0_2, %c0_3] : memref<1x1x1x256xf32, #tpu.memory_space<vmem>>, vector<1x1x1x256xf32>
    %4 = vector.shape_cast %3 : vector<1x1x1x256xf32> to vector<1x256xf32>
    %5 = tpu.iota {dimensions = array<i32: 0>} : vector<256x1xi32>
    %6 = arith.sitofp %5 : vector<256x1xi32> to vector<256x1xf32>
    %7 = vector.broadcast %4 : vector<1x256xf32> to vector<256x256xf32>
    %8 = vector.broadcast %6 : vector<256x1xf32> to vector<256x256xf32>
    %9 = arith.cmpf oeq, %7, %8 : vector<256x256xf32>
    %10 = arith.extui %9 : vector<256x256xi1> to vector<256x256xi32>
    %11 = arith.sitofp %10 : vector<256x256xi32> to vector<256x256xf32>
    %12 = arith.truncf %11 : vector<256x256xf32> to vector<256x256xbf16>
    %cst = arith.constant 1.000000e+00 : bf16
    %13 = vector.broadcast %cst : bf16 to vector<256x1xbf16>
    %c0_4 = arith.constant 0 : index
    %c0_5 = arith.constant 0 : index
    %14 = vector.load %arg4[%c0_4, %c0_5] : memref<256x1xf32, #tpu.memory_space<vmem>>, vector<256x1xf32>
    %cst_6 = arith.constant dense<0.000000e+00> : vector<256x1xf32>
    %15 = tpu.matmul %12, %13, %cst_6 {dimension_numbers = #tpu.dot_dimension_numbers<[1], [0], [0], [1], [0, 0, 1, 1], [], []>} : vector<256x256xbf16>, vector<256x1xbf16>, vector<256x1xf32> -> vector<256x1xf32>
    %16 = arith.addf %14, %15 : vector<256x1xf32>
    %c0_7 = arith.constant 0 : index
    %c0_8 = arith.constant 0 : index
    %17 = vector.load %arg4[%c0_7, %c0_8] : memref<256x1xf32, #tpu.memory_space<vmem>>, vector<256x1xf32>
    tpu.vector_store %arg4[%c0_7, %c0_8], %16 {strides = array<i32>} : memref<256x1xf32, #tpu.memory_space<vmem>>, vector<256x1xf32>,
    %c0_i32_9 = arith.constant 0 : i32
    %18 = arith.cmpi eq, %arg1, %c0_i32_9 : i32
    %19 = arith.extui %18 : i1 to i32
    %c0_i32_10 = arith.constant 0 : i32
    %20 = arith.cmpi ne, %19, %c0_i32_10 : i32
    scf.if %20 {
      %c0_11 = arith.constant 0 : index
      %c0_12 = arith.constant 0 : index
      %21 = vector.load %arg4[%c0_11, %c0_12] : memref<256x1xf32, #tpu.memory_space<vmem>>, vector<256x1xf32>
      %22 = tpu.iota {dimensions = array<i32: 0>} : vector<256x1xi32>
      %23 = arith.sitofp %22 : vector<256x1xi32> to vector<256x1xf32>
      %cst_13 = arith.constant 0.000000e+00 : f32
      %24 = vector.broadcast %cst_13 : f32 to vector<256x1xf32>
      %25 = arith.cmpf ogt, %21, %24 : vector<256x1xf32>
      %cst_14 = arith.constant -1.000000e+00 : f32
      %26 = vector.broadcast %cst_14 : f32 to vector<256x1xf32>
      %27 = arith.select %25, %23, %26 : vector<256x1xi1>, vector<256x1xf32>
      %cst_15 = arith.constant dense<0xFF800000> : vector<1xf32>
      %28 = vector.multi_reduction <maximumf>, %27, %cst_15 [0] : vector<256x1xf32> to vector<1xf32>
      %29 = vector.shape_cast %28 : vector<1xf32> to vector<1x1xf32>
      %30 = vector.broadcast %29 : vector<1x1xf32> to vector<256x1xf32>
      %31 = arith.cmpf oeq, %23, %30 : vector<256x1xf32>
      %cst_16 = arith.constant 0.000000e+00 : f32
      %32 = vector.broadcast %cst_16 : f32 to vector<256x1xf32>
      %33 = arith.select %31, %21, %32 : vector<256x1xi1>, vector<256x1xf32>
      %cst_17 = arith.constant dense<0.000000e+00> : vector<1xf32>
      %34 = vector.multi_reduction <add>, %33, %cst_17 [0] : vector<256x1xf32> to vector<1xf32>
      %35 = vector.shape_cast %34 : vector<1xf32> to vector<1x1xf32>
      %cst_18 = arith.constant dense<0.000000e+00> : vector<1xf32>
      %36 = vector.multi_reduction <add>, %21, %cst_18 [0] : vector<256x1xf32> to vector<1xf32>
      %37 = vector.shape_cast %36 : vector<1xf32> to vector<1x1xf32>
      %38 = arith.subf %37, %35 : vector<1x1xf32>
      %cst_19 = arith.constant 2.550000e+02 : f32
      %39 = vector.broadcast %cst_19 : f32 to vector<1x1xf32>
      %40 = arith.divf %38, %39 : vector<1x1xf32>
      %41 = math.floor %40 : vector<1x1xf32>
      %42 = arith.mulf %41, %39 : vector<1x1xf32>
      %43 = arith.subf %38, %42 : vector<1x1xf32>
      %44 = arith.cmpf oge, %43, %39 : vector<1x1xf32>
      %45 = arith.extui %44 : vector<1x1xi1> to vector<1x1xi32>
      %46 = arith.sitofp %45 : vector<1x1xi32> to vector<1x1xf32>
      %47 = arith.addf %41, %46 : vector<1x1xf32>
      %cst_20 = arith.constant 0.000000e+00 : f32
      %48 = vector.broadcast %cst_20 : f32 to vector<1x1xf32>
      %49 = arith.cmpf olt, %43, %48 : vector<1x1xf32>
      %50 = arith.extui %49 : vector<1x1xi1> to vector<1x1xi32>
      %51 = arith.sitofp %50 : vector<1x1xi32> to vector<1x1xf32>
      %52 = arith.subf %47, %51 : vector<1x1xf32>
      %53 = tpu.iota {dimensions = array<i32: 0>} : vector<256x256xi32>
      %54 = arith.sitofp %53 : vector<256x256xi32> to vector<256x256xf32>
      %55 = tpu.iota {dimensions = array<i32: 1>} : vector<256x256xi32>
      %56 = arith.sitofp %55 : vector<256x256xi32> to vector<256x256xf32>
      %57 = arith.cmpf olt, %56, %54 : vector<256x256xf32>
      %58 = arith.extui %57 : vector<256x256xi1> to vector<256x256xi32>
      %59 = arith.sitofp %58 : vector<256x256xi32> to vector<256x256xf32>
      %cst_21 = arith.constant dense<0.000000e+00> : vector<256x1xf32>
      %60 = tpu.matmul %59, %21, %cst_21 {dimension_numbers = #tpu.dot_dimension_numbers<[1], [0], [0], [1], [0, 0, 1, 1], [], []>} : vector<256x256xf32>, vector<256x1xf32>, vector<256x1xf32> -> vector<256x1xf32>
      %cst_22 = arith.constant 1.000000e+00 : f32
      %61 = vector.broadcast %cst_22 : f32 to vector<1x1xf32>
      %62 = arith.maximumf %52, %61 : vector<1x1xf32>
      %cst_23 = arith.constant 5.000000e-01 : f32
      %63 = vector.broadcast %cst_23 : f32 to vector<1x1xf32>
      %64 = arith.mulf %52, %63 : vector<1x1xf32>
      %65 = math.floor %64 : vector<1x1xf32>
      %66 = vector.broadcast %65 : vector<1x1xf32> to vector<256x1xf32>
      %67 = arith.addf %60, %66 : vector<256x1xf32>
      %68 = vector.broadcast %62 : vector<1x1xf32> to vector<256x1xf32>
      %69 = arith.divf %67, %68 : vector<256x1xf32>
      %70 = math.floor %69 : vector<256x1xf32>
      %71 = vector.broadcast %62 : vector<1x1xf32> to vector<256x1xf32>
      %72 = arith.mulf %70, %71 : vector<256x1xf32>
      %73 = arith.subf %67, %72 : vector<256x1xf32>
      %74 = vector.broadcast %62 : vector<1x1xf32> to vector<256x1xf32>
      %75 = arith.cmpf oge, %73, %74 : vector<256x1xf32>
      %76 = arith.extui %75 : vector<256x1xi1> to vector<256x1xi32>
      %77 = arith.sitofp %76 : vector<256x1xi32> to vector<256x1xf32>
      %78 = arith.addf %70, %77 : vector<256x1xf32>
      %cst_24 = arith.constant 0.000000e+00 : f32
      %79 = vector.broadcast %cst_24 : f32 to vector<256x1xf32>
      %80 = arith.cmpf olt, %73, %79 : vector<256x1xf32>
      %81 = arith.extui %80 : vector<256x1xi1> to vector<256x1xi32>
      %82 = arith.sitofp %81 : vector<256x1xi32> to vector<256x1xf32>
      %83 = arith.subf %78, %82 : vector<256x1xf32>
      %cst_25 = arith.constant 0.000000e+00 : f32
      %cst_26 = arith.constant 2.550000e+02 : f32
      %84 = vector.broadcast %cst_25 : f32 to vector<256x1xf32>
      %85 = arith.maximumf %84, %83 : vector<256x1xf32>
      %86 = vector.broadcast %cst_26 : f32 to vector<256x1xf32>
      %87 = arith.minimumf %86, %85 : vector<256x1xf32>
      %cst_27 = arith.constant 1.000000e+00 : f32
      %88 = vector.broadcast %cst_27 : f32 to vector<1x1xf32>
      %89 = arith.cmpf oge, %52, %88 : vector<1x1xf32>
      %90 = vector.shape_cast %89 : vector<1x1xi1> to vector<1x1xi1>
      %91 = vector.broadcast %90 : vector<1x1xi1> to vector<256x1xi1>
      %92 = arith.select %91, %87, %23 : vector<256x1xi1>, vector<256x1xf32>
      %c0_28 = arith.constant 0 : index
      %c0_29 = arith.constant 0 : index
      %c0_30 = arith.constant 0 : index
      %93 = vector.load %arg3[%c0_28, %c0_29, %c0_30] : memref<1x256x1xf32, #tpu.memory_space<vmem>>, vector<1x256x1xf32>
      %94 = vector.shape_cast %93 : vector<1x256x1xf32> to vector<256x1xf32>
      %95 = vector.shape_cast %92 : vector<256x1xf32> to vector<1x256x1xf32>
      tpu.vector_store %arg3[%c0_28, %c0_29, %c0_30], %95 {strides = array<i32>} : memref<1x256x1xf32, #tpu.memory_space<vmem>>, vector<1x256x1xf32>,
    } else {
    }
    return
  }
  func.func @transform_0(%arg0: i32, %arg1: i32) -> (i32, i32, i32, i32) {
    %c0_i32 = arith.constant 0 : i32
    %c0_i32_0 = arith.constant 0 : i32
    %c0_i32_1 = arith.constant 0 : i32
    return %arg0, %arg1, %c0_i32, %c0_i32_0 : i32, i32, i32, i32
  }
  func.func @transform_1(%arg0: i32, %arg1: i32) -> (i32, i32, i32) {
    %c0_i32 = arith.constant 0 : i32
    %c0_i32_0 = arith.constant 0 : i32
    %c0_i32_1 = arith.constant 0 : i32
    return %arg0, %c0_i32, %c0_i32_0 : i32, i32, i32
  }
}

</mosaic_0001>

<llo_original>
// kernel: tpu_custom_call.1
$region0: #{tpu_custom_call.1}
  #allocation0 [shape = 'u32[]', space=smem, size = 0x4, offset = 0x4, fixed_abs, tag = 'smem constant byte address 0x4 - core index']
  #allocation1 [shape = 'u32[144,128]{1,0:T(1,128)}', space=vmem, size = 0x12000, scoped, tag = 'internal scratch']
  #allocation2 [shape = 'f32[256,1]{1,0:T(8,128)}', space=vmem, size = 0x20000, scoped, tag = 'scratch operand']
  %s0 = inlined_call_operand.hbm [shape: f32[3,1,1,256], index: 0, kind: input, shape index: {}]
  %s1 = inlined_call_operand.vmem [shape: f32[3,256,1], index: 1, kind: output, shape index: {}]
  %s2 = sld [smem:[#allocation0]]
  $region49: #{tpu_custom_call.1} parent=0
    _
  %s4 = ssub.s32 1, %s2
  %s5 = scalar_select 0, %s4, %s2
  $region1: #{tpu_custom_call.1} parent=0
    #allocation3 [shape = 'u8[2048]{0}', space=vmem, size = 0x800, scoped, tag = 'input window, operand 0']
    #allocation4 [shape = 's32[2]{0}', space=sflag, size = 0x8, scoped, tag = 'scoped memory for tpu_custom_call.1']
    %6 = vsyncpa [#allocation4], 0
    %s7 = scalar_lea.sflag [#allocation4], 1
    %8 = vsyncpa %s7, 0
    loop: start=0, step=1, limit=5
    $region2: #{tpu_custom_call.1} parent=1 // loop_pre_header
      _
    $region3: #{tpu_custom_call.1} parent=1 // loop_header
      %s10 = sphi 0, %s14
      %p11 = scmp.ge.s32.totalorder %s10, 5
      %s17 = sphi 0, %s29
      %s18 = sphi 0, %s25
      %s19 = sphi 0, %s17
      %s20 = sphi 0, %s18
      %s21 = sphi 0, %s19
      %s22 = sphi 0, %s20
      %s34 = sphi 0, %s36
      %s37 = sphi 0, %s34
      %s38 = sphi 0, %s37
      %s54 = sphi 0, %s38
      %s60 = sphi 0, %s62
      %s63 = sphi 0, %s60
      %s64 = sphi 0, %s63
      %s80 = sphi 0, %s64
    $region4: #{tpu_custom_call.1} parent=1 // loop_header_branch
      %13 = sbr.rel (%p11) target = $region8
    $region5: #{tpu_custom_call.1} parent=1 // loop_body
      %s15 = ssub.s32 %s10, 1
      %s16 = ssub.s32 %s10, 2
      %s23 = sadd.s32 1, %s18
      %p24 = scmp.ge.s32.totalorder %s23, 1
      %s25 = scalar_select %p24, 0, %s23
      %s26 = sadd.s32 1, %s17
      %s27 = scalar_select %p24, %s26, %s17
      %p28 = scmp.ge.s32.totalorder %s27, 3
      %s29 = scalar_select %p28, 0, %s27
      %s30 = ssub.s32 %s17, %s29
      %s31 = ssub.s32 %s18, %s25
      %s32 = sor.u32 %s30, %s31
      %p33 = scmp.eq.s32.totalorder %s32, 0
      %s35 = sadd.s32 %s34, 1
      %s36 = scalar_select %p33, %s34, %s35
      %p39 = pneg %p33
      %p40 = scmp.eq.s32.totalorder %s10, 2
      %p41 = por %p39, %p40
      %p42 = scmp.ne.s32.totalorder %s34, %s37
      %p43 = scmp.eq.s32.totalorder %s10, 0
      %p44 = por %p42, %p43
      %p45 = scmp.ne.s32.totalorder %s34, %s37
      %p46 = scmp.eq.s32.totalorder %s15, 2
      %p47 = por %p45, %p46
      %p48 = scmp.ne.s32.totalorder %s37, %s38
      %p49 = scmp.eq.s32.totalorder %s15, 0
      %p50 = por %p48, %p49
      %p51 = scmp.ne.s32.totalorder %s37, %s38
      %p52 = scmp.eq.s32.totalorder %s16, 2
      %p53 = por %p51, %p52
      %p55 = scmp.ne.s32.totalorder %s38, %s54
      %p56 = scmp.eq.s32.totalorder %s16, 0
      %p57 = por %p55, %p56
      %s58 = ssub.s32 %s17, %s29
      %p59 = scmp.eq.s32.totalorder %s58, 0
      %s61 = sadd.s32 %s60, 1
      %s62 = scalar_select %p59, %s60, %s61
      %p65 = pneg %p59
      %p66 = scmp.eq.s32.totalorder %s10, 2
      %p67 = por %p65, %p66
      %p68 = scmp.ne.s32.totalorder %s60, %s63
      %p69 = scmp.eq.s32.totalorder %s10, 0
      %p70 = por %p68, %p69
      %p71 = scmp.ne.s32.totalorder %s60, %s63
      %p72 = scmp.eq.s32.totalorder %s15, 2
      %p73 = por %p71, %p72
      %p74 = scmp.ne.s32.totalorder %s63, %s64
      %p75 = scmp.eq.s32.totalorder %s15, 0
      %p76 = por %p74, %p75
      %p77 = scmp.ne.s32.totalorder %s63, %s64
      %p78 = scmp.eq.s32.totalorder %s16, 2
      %p79 = por %p77, %p78
      %p81 = scmp.ne.s32.totalorder %s64, %s80
      %p82 = scmp.eq.s32.totalorder %s16, 0
      %p83 = por %p81, %p82
      %p84 = scmp.le.s32.totalorder 1, %s10
      %p85 = scmp.lt.s32.totalorder %s10, 4
      %p86 = pnand %p84, %p85
      %p87 = pneg %p86
      // Predicated region
      $region9: #{tpu_custom_call.1} parent=5 // pred_check
        _
      $region10: #{tpu_custom_call.1} parent=5 // pred_check_branch
        %89 = sbr.rel (%p86) target = $region12
      $region11: #{tpu_custom_call.1} parent=5 // pred_region
        %s90 = ssub.s32 %s10, 1
      $region12: #{tpu_custom_call.1} parent=5 // pred_fallthru
        _
      %p91 = scmp.lt.s32.totalorder %s10, 3
      // Predicated region
      $region13: #{tpu_custom_call.1} parent=5 // pred_check
        %p92 = pneg %p91
      $region14: #{tpu_custom_call.1} parent=5 // pred_check_branch
        %94 = sbr.rel (%p92) target = $region16
      $region15: #{tpu_custom_call.1} parent=5 // pred_region
        // Predicated region
        $region17: #{tpu_custom_call.1} parent=15 // pred_check
          %p95 = pneg %p44
        $region18: #{tpu_custom_call.1} parent=15 // pred_check_branch
          %97 = sbr.rel (%p95) target = $region20
        $region19: #{tpu_custom_call.1} parent=15 // pred_region
          %s98 = sand.u32 %s34, 1
          %s99 = scalar_lea.sflag [#allocation4], %s98
          %s100 = sand.u32 %s34, 1
          %s101 = smul.addr %s100, 2
          %s102 = scalar_lea.vmem [#allocation3], %s101
          %s104 = ssub.s32 32, 32
          %105 = vsyncadd %s99, %s104
          %s106 = smul.addr %s18, 2
          %s107 = smul.addr %s17, 2
          %s108 = sadd.s32 %s106, %s107
          %s109 = smul.addr %s108, 16
          %s110 = scalar_lea.hbm %s0, %s109
          %s112 = sshll.u32 %s102, 4
          %s113 = int_to_ptr.vmem [resolvable:$true] %s112
          %115 = dma.hbm_to_vmem [thread:$0]  %s110, 32, %s113, %s99
        $region20: #{tpu_custom_call.1} parent=15 // pred_fallthru
          _
      $region16: #{tpu_custom_call.1} parent=5 // pred_fallthru
        _
      %p116 = scmp.le.s32.totalorder 1, %s10
      %p117 = scmp.lt.s32.totalorder %s10, 4
      %p118 = pnand %p116, %p117
      %p119 = pneg %p118
      // Predicated region
      $region21: #{tpu_custom_call.1} parent=5 // pred_check
        _
      $region22: #{tpu_custom_call.1} parent=5 // pred_check_branch
        %121 = sbr.rel (%p118) target = $region24
      $region23: #{tpu_custom_call.1} parent=5 // pred_region
        %s122 = ssub.s32 %s10, 1
        %s123 = sand.u32 %s37, 1
        %s124 = scalar_lea.sflag [#allocation4], %s123
        %s125 = sand.u32 %s37, 1
        %s126 = smul.addr %s125, 2
        %s127 = scalar_lea.vmem [#allocation3], %s126
        // Predicated region
        $region25: #{tpu_custom_call.1} parent=23 // pred_check
          %p128 = pneg %p50
        $region26: #{tpu_custom_call.1} parent=23 // pred_check_branch
          %130 = sbr.rel (%p128) target = $region28
        $region27: #{tpu_custom_call.1} parent=23 // pred_region
          %131 = dma.done %s124, 32
        $region28: #{tpu_custom_call.1} parent=23 // pred_fallthru
          _
        %s132 = sand.u32 %s37, 1
        %s133 = scalar_lea.sflag [#allocation4], %s132
        %s134 = sand.u32 %s37, 1
        %s135 = smul.addr %s134, 2
        %s136 = scalar_lea.vmem [#allocation3], %s135
        %p137 = pneg %p50
        %p138 = pneg %p47
        %p139 = pneg %p76
        %p140 = pneg %p73
        %p141 = scmp.lt.s32.totalorder %s19, 2
        %s142 = scalar_select %p141, %s19, 2
        %s143 = smul.addr %s142, 32
        %s144 = smul.addr %s143, 8
        %s145 = scalar_lea.vmem %s1, %s144
        %p146 = scmp.lt.s32.totalorder %s19, 2
        %s147 = scalar_select %p146, %s19, 2
        %s148 = smul.addr %s147, 32
        %s149 = smul.addr %s148, 8
        %s150 = scalar_lea.vmem %s1, %s149
        %p153 = scmp.eq.s32.totalorder %s20, 0
        // Predicated region
        $region29: #{tpu_custom_call.1} parent=23 // pred_check
          %p154 = pneg %p153
        $region30: #{tpu_custom_call.1} parent=23 // pred_check_branch
          %156 = sbr.rel (%p154) target = $region32
        $region31: #{tpu_custom_call.1} parent=23 // pred_region
          %vm157 = vcmask 7168
          %158 = vst.msk [vmem:[#allocation2] sm:$0xff] %vm157, 0.0
          %159 = vst.msk [vmem:[#allocation2 + $0x8] sm:$0xff] %vm157, 0.0
          %160 = vst.msk [vmem:[#allocation2 + $0x10] sm:$0xff] %vm157, 0.0
          %161 = vst.msk [vmem:[#allocation2 + $0x18] sm:$0xff] %vm157, 0.0
          %162 = vst.msk [vmem:[#allocation2 + $0x20] sm:$0xff] %vm157, 0.0
          %163 = vst.msk [vmem:[#allocation2 + $0x28] sm:$0xff] %vm157, 0.0
          %164 = vst.msk [vmem:[#allocation2 + $0x30] sm:$0xff] %vm157, 0.0
          %165 = vst.msk [vmem:[#allocation2 + $0x38] sm:$0xff] %vm157, 0.0
          %166 = vst.msk [vmem:[#allocation2 + $0x40] sm:$0xff] %vm157, 0.0
          %167 = vst.msk [vmem:[#allocation2 + $0x48] sm:$0xff] %vm157, 0.0
          %168 = vst.msk [vmem:[#allocation2 + $0x50] sm:$0xff] %vm157, 0.0
          %169 = vst.msk [vmem:[#allocation2 + $0x58] sm:$0xff] %vm157, 0.0
          %170 = vst.msk [vmem:[#allocation2 + $0x60] sm:$0xff] %vm157, 0.0
          %171 = vst.msk [vmem:[#allocation2 + $0x68] sm:$0xff] %vm157, 0.0
          %172 = vst.msk [vmem:[#allocation2 + $0x70] sm:$0xff] %vm157, 0.0
          %173 = vst.msk [vmem:[#allocation2 + $0x78] sm:$0xff] %vm157, 0.0
          %174 = vst.msk [vmem:[#allocation2 + $0x80] sm:$0xff] %vm157, 0.0
          %175 = vst.msk [vmem:[#allocation2 + $0x88] sm:$0xff] %vm157, 0.0
          %176 = vst.msk [vmem:[#allocation2 + $0x90] sm:$0xff] %vm157, 0.0
          %177 = vst.msk [vmem:[#allocation2 + $0x98] sm:$0xff] %vm157, 0.0
          %178 = vst.msk [vmem:[#allocation2 + $0xa0] sm:$0xff] %vm157, 0.0
          %179 = vst.msk [vmem:[#allocation2 + $0xa8] sm:$0xff] %vm157, 0.0
          %180 = vst.msk [vmem:[#allocation2 + $0xb0] sm:$0xff] %vm157, 0.0
          %181 = vst.msk [vmem:[#allocation2 + $0xb8] sm:$0xff] %vm157, 0.0
          %182 = vst.msk [vmem:[#allocation2 + $0xc0] sm:$0xff] %vm157, 0.0
          %183 = vst.msk [vmem:[#allocation2 + $0xc8] sm:$0xff] %vm157, 0.0
          %184 = vst.msk [vmem:[#allocation2 + $0xd0] sm:$0xff] %vm157, 0.0
          %185 = vst.msk [vmem:[#allocation2 + $0xd8] sm:$0xff] %vm157, 0.0
          %186 = vst.msk [vmem:[#allocation2 + $0xe0] sm:$0xff] %vm157, 0.0
          %187 = vst.msk [vmem:[#allocation2 + $0xe8] sm:$0xff] %vm157, 0.0
          %188 = vst.msk [vmem:[#allocation2 + $0xf0] sm:$0xff] %vm157, 0.0
          %189 = vst.msk [vmem:[#allocation2 + $0xf8] sm:$0xff] %vm157, 0.0
        $region32: #{tpu_custom_call.1} parent=23 // pred_fallthru
          _
        %v190 = vld [vmem:[%s127] sm:$0x3]
        %v191 = vlaneseq
        %v192 = vshrl.u32 %v191, 7
        %v193 = vadd.s32 %v192, 8
        %v194 = vadd.s32 %v192, 16
        %v195 = vadd.s32 %v192, 24
        %v196 = vadd.s32 %v192, 32
        %v197 = vadd.s32 %v192, 40
        %v198 = vadd.s32 %v192, 48
        %v199 = vadd.s32 %v192, 56
        %v200 = vadd.s32 %v192, 64
        %v201 = vadd.s32 %v192, 72
        %v202 = vadd.s32 %v192, 80
        %v203 = vadd.s32 %v192, 88
        %v204 = vadd.s32 %v192, 96
        %v205 = vadd.s32 %v192, 104
        %v206 = vadd.s32 %v192, 112
        %v207 = vadd.s32 %v192, 120
        %v208 = vadd.s32 %v192, 128
        %v209 = vadd.s32 %v192, 136
        %v210 = vadd.s32 %v192, 144
        %v211 = vadd.s32 %v192, 152
        %v212 = vadd.s32 %v192, 160
        %v213 = vadd.s32 %v192, 168
        %v214 = vadd.s32 %v192, 176
        %v215 = vadd.s32 %v192, 184
        %v216 = vadd.s32 %v192, 192
        %v217 = vadd.s32 %v192, 200
        %v218 = vadd.s32 %v192, 208
        %v219 = vadd.s32 %v192, 216
        %v220 = vadd.s32 %v192, 224
        %v221 = vadd.s32 %v192, 232
        %v222 = vadd.s32 %v192, 240
        %v223 = vadd.s32 %v192, 248
        %v224 = vcvt.s32.f32 %v192
        %v225 = vcvt.s32.f32 %v193
        %v226 = vcvt.s32.f32 %v194
        %v227 = vcvt.s32.f32 %v195
        %v228 = vcvt.s32.f32 %v196
        %v229 = vcvt.s32.f32 %v197
        %v230 = vcvt.s32.f32 %v198
        %v231 = vcvt.s32.f32 %v199
        %v232 = vcvt.s32.f32 %v200
        %v233 = vcvt.s32.f32 %v201
        %v234 = vcvt.s32.f32 %v202
        %v235 = vcvt.s32.f32 %v203
        %v236 = vcvt.s32.f32 %v204
        %v237 = vcvt.s32.f32 %v205
        %v238 = vcvt.s32.f32 %v206
        %v239 = vcvt.s32.f32 %v207
        %v240 = vcvt.s32.f32 %v208
        %v241 = vcvt.s32.f32 %v209
        %v242 = vcvt.s32.f32 %v210
        %v243 = vcvt.s32.f32 %v211
        %v244 = vcvt.s32.f32 %v212
        %v245 = vcvt.s32.f32 %v213
        %v246 = vcvt.s32.f32 %v214
        %v247 = vcvt.s32.f32 %v215
        %v248 = vcvt.s32.f32 %v216
        %v249 = vcvt.s32.f32 %v217
        %v250 = vcvt.s32.f32 %v218
        %v251 = vcvt.s32.f32 %v219
        %v252 = vcvt.s32.f32 %v220
        %v253 = vcvt.s32.f32 %v221
        %v254 = vcvt.s32.f32 %v222
        %v255 = vcvt.s32.f32 %v223
        %v257 = vlaneseq
        %v258 = vshrl.u32 %v257, 7
        %v259 = vsub.s32 0, %v258
        %v260 = vrot.slane %v190, %v259
        %v261 = vlaneseq
        %v262 = vshrl.u32 %v261, 7
        %v263 = vsub.s32 1, %v262
        %v264 = vrot.slane %v190, %v263
        %vm267 = vcmp.eq.f32.partialorder %v260, %v224
        %vm268 = vcmp.eq.f32.partialorder %v264, %v224
        %vm269 = vcmp.eq.f32.partialorder %v260, %v225
        %vm270 = vcmp.eq.f32.partialorder %v264, %v225
        %vm271 = vcmp.eq.f32.partialorder %v260, %v226
        %vm272 = vcmp.eq.f32.partialorder %v264, %v226
        %vm273 = vcmp.eq.f32.partialorder %v260, %v227
        %vm274 = vcmp.eq.f32.partialorder %v264, %v227
        %vm275 = vcmp.eq.f32.partialorder %v260, %v228
        %vm276 = vcmp.eq.f32.partialorder %v264, %v228
        %vm277 = vcmp.eq.f32.partialorder %v260, %v229
        %vm278 = vcmp.eq.f32.partialorder %v264, %v229
        %vm279 = vcmp.eq.f32.partialorder %v260, %v230
        %vm280 = vcmp.eq.f32.partialorder %v264, %v230
        %vm281 = vcmp.eq.f32.partialorder %v260, %v231
        %vm282 = vcmp.eq.f32.partialorder %v264, %v231
        %vm283 = vcmp.eq.f32.partialorder %v260, %v232
        %vm284 = vcmp.eq.f32.partialorder %v264, %v232
        %vm285 = vcmp.eq.f32.partialorder %v260, %v233
        %vm286 = vcmp.eq.f32.partialorder %v264, %v233
        %vm287 = vcmp.eq.f32.partialorder %v260, %v234
        %vm288 = vcmp.eq.f32.partialorder %v264, %v234
        %vm289 = vcmp.eq.f32.partialorder %v260, %v235
        %vm290 = vcmp.eq.f32.partialorder %v264, %v235
        %vm291 = vcmp.eq.f32.partialorder %v260, %v236
        %vm292 = vcmp.eq.f32.partialorder %v264, %v236
        %vm293 = vcmp.eq.f32.partialorder %v260, %v237
        %vm294 = vcmp.eq.f32.partialorder %v264, %v237
        %vm295 = vcmp.eq.f32.partialorder %v260, %v238
        %vm296 = vcmp.eq.f32.partialorder %v264, %v238
        %vm297 = vcmp.eq.f32.partialorder %v260, %v239
        %vm298 = vcmp.eq.f32.partialorder %v264, %v239
        %vm299 = vcmp.eq.f32.partialorder %v260, %v240
        %vm300 = vcmp.eq.f32.partialorder %v264, %v240
        %vm301 = vcmp.eq.f32.partialorder %v260, %v241
        %vm302 = vcmp.eq.f32.partialorder %v264, %v241
        %vm303 = vcmp.eq.f32.partialorder %v260, %v242
        %vm304 = vcmp.eq.f32.partialorder %v264, %v242
        %vm305 = vcmp.eq.f32.partialorder %v260, %v243
        %vm306 = vcmp.eq.f32.partialorder %v264, %v243
        %vm307 = vcmp.eq.f32.partialorder %v260, %v244
        %vm308 = vcmp.eq.f32.partialorder %v264, %v244
        %vm309 = vcmp.eq.f32.partialorder %v260, %v245
        %vm310 = vcmp.eq.f32.partialorder %v264, %v245
        %vm311 = vcmp.eq.f32.partialorder %v260, %v246
        %vm312 = vcmp.eq.f32.partialorder %v264, %v246
        %vm313 = vcmp.eq.f32.partialorder %v260, %v247
        %vm314 = vcmp.eq.f32.partialorder %v264, %v247
        %vm315 = vcmp.eq.f32.partialorder %v260, %v248
        %vm316 = vcmp.eq.f32.partialorder %v264, %v248
        %vm317 = vcmp.eq.f32.partialorder %v260, %v249
        %vm318 = vcmp.eq.f32.partialorder %v264, %v249
        %vm319 = vcmp.eq.f32.partialorder %v260, %v250
        %vm320 = vcmp.eq.f32.partialorder %v264, %v250
        %vm321 = vcmp.eq.f32.partialorder %v260, %v251
        %vm322 = vcmp.eq.f32.partialorder %v264, %v251
        %vm323 = vcmp.eq.f32.partialorder %v260, %v252
        %vm324 = vcmp.eq.f32.partialorder %v264, %v252
        %vm325 = vcmp.eq.f32.partialorder %v260, %v253
        %vm326 = vcmp.eq.f32.partialorder %v264, %v253
        %vm327 = vcmp.eq.f32.partialorder %v260, %v254
        %vm328 = vcmp.eq.f32.partialorder %v264, %v254
        %vm329 = vcmp.eq.f32.partialorder %v260, %v255
        %vm330 = vcmp.eq.f32.partialorder %v264, %v255
        %v331 = vsel %vm267, 1, 0
        %v332 = vsel %vm268, 1, 0
        %v333 = vsel %vm269, 1, 0
        %v334 = vsel %vm270, 1, 0
        %v335 = vsel %vm271, 1, 0
        %v336 = vsel %vm272, 1, 0
        %v337 = vsel %vm273, 1, 0
        %v338 = vsel %vm274, 1, 0
        %v339 = vsel %vm275, 1, 0
        %v340 = vsel %vm276, 1, 0
        %v341 = vsel %vm277, 1, 0
        %v342 = vsel %vm278, 1, 0
        %v343 = vsel %vm279, 1, 0
        %v344 = vsel %vm280, 1, 0
        %v345 = vsel %vm281, 1, 0
        %v346 = vsel %vm282, 1, 0
        %v347 = vsel %vm283, 1, 0
        %v348 = vsel %vm284, 1, 0
        %v349 = vsel %vm285, 1, 0
        %v350 = vsel %vm286, 1, 0
        %v351 = vsel %vm287, 1, 0
        %v352 = vsel %vm288, 1, 0
        %v353 = vsel %vm289, 1, 0
        %v354 = vsel %vm290, 1, 0
        %v355 = vsel %vm291, 1, 0
        %v356 = vsel %vm292, 1, 0
        %v357 = vsel %vm293, 1, 0
        %v358 = vsel %vm294, 1, 0
        %v359 = vsel %vm295, 1, 0
        %v360 = vsel %vm296, 1, 0
        %v361 = vsel %vm297, 1, 0
        %v362 = vsel %vm298, 1, 0
        %v363 = vsel %vm299, 1, 0
        %v364 = vsel %vm300, 1, 0
        %v365 = vsel %vm301, 1, 0
        %v366 = vsel %vm302, 1, 0
        %v367 = vsel %vm303, 1, 0
        %v368 = vsel %vm304, 1, 0
        %v369 = vsel %vm305, 1, 0
        %v370 = vsel %vm306, 1, 0
        %v371 = vsel %vm307, 1, 0
        %v372 = vsel %vm308, 1, 0
        %v373 = vsel %vm309, 1, 0
        %v374 = vsel %vm310, 1, 0
        %v375 = vsel %vm311, 1, 0
        %v376 = vsel %vm312, 1, 0
        %v377 = vsel %vm313, 1, 0
        %v378 = vsel %vm314, 1, 0
        %v379 = vsel %vm315, 1, 0
        %v380 = vsel %vm316, 1, 0
        %v381 = vsel %vm317, 1, 0
        %v382 = vsel %vm318, 1, 0
        %v383 = vsel %vm319, 1, 0
        %v384 = vsel %vm320, 1, 0
        %v385 = vsel %vm321, 1, 0
        %v386 = vsel %vm322, 1, 0
        %v387 = vsel %vm323, 1, 0
        %v388 = vsel %vm324, 1, 0
        %v389 = vsel %vm325, 1, 0
        %v390 = vsel %vm326, 1, 0
        %v391 = vsel %vm327, 1, 0
        %v392 = vsel %vm328, 1, 0
        %v393 = vsel %vm329, 1, 0
        %v394 = vsel %vm330, 1, 0
        %v395 = vcvt.s32.f32 %v331
        %v396 = vcvt.s32.f32 %v332
        %v397 = vcvt.s32.f32 %v333
        %v398 = vcvt.s32.f32 %v334
        %v399 = vcvt.s32.f32 %v335
        %v400 = vcvt.s32.f32 %v336
        %v401 = vcvt.s32.f32 %v337
        %v402 = vcvt.s32.f32 %v338
        %v403 = vcvt.s32.f32 %v339
        %v404 = vcvt.s32.f32 %v340
        %v405 = vcvt.s32.f32 %v341
        %v406 = vcvt.s32.f32 %v342
        %v407 = vcvt.s32.f32 %v343
        %v408 = vcvt.s32.f32 %v344
        %v409 = vcvt.s32.f32 %v345
        %v410 = vcvt.s32.f32 %v346
        %v411 = vcvt.s32.f32 %v347
        %v412 = vcvt.s32.f32 %v348
        %v413 = vcvt.s32.f32 %v349
        %v414 = vcvt.s32.f32 %v350
        %v415 = vcvt.s32.f32 %v351
        %v416 = vcvt.s32.f32 %v352
        %v417 = vcvt.s32.f32 %v353
        %v418 = vcvt.s32.f32 %v354
        %v419 = vcvt.s32.f32 %v355
        %v420 = vcvt.s32.f32 %v356
        %v421 = vcvt.s32.f32 %v357
        %v422 = vcvt.s32.f32 %v358
        %v423 = vcvt.s32.f32 %v359
        %v424 = vcvt.s32.f32 %v360
        %v425 = vcvt.s32.f32 %v361
        %v426 = vcvt.s32.f32 %v362
        %v427 = vcvt.s32.f32 %v363
        %v428 = vcvt.s32.f32 %v364
        %v429 = vcvt.s32.f32 %v365
        %v430 = vcvt.s32.f32 %v366
        %v431 = vcvt.s32.f32 %v367
        %v432 = vcvt.s32.f32 %v368
        %v433 = vcvt.s32.f32 %v369
        %v434 = vcvt.s32.f32 %v370
        %v435 = vcvt.s32.f32 %v371
        %v436 = vcvt.s32.f32 %v372
        %v437 = vcvt.s32.f32 %v373
        %v438 = vcvt.s32.f32 %v374
        %v439 = vcvt.s32.f32 %v375
        %v440 = vcvt.s32.f32 %v376
        %v441 = vcvt.s32.f32 %v377
        %v442 = vcvt.s32.f32 %v378
        %v443 = vcvt.s32.f32 %v379
        %v444 = vcvt.s32.f32 %v380
        %v445 = vcvt.s32.f32 %v381
        %v446 = vcvt.s32.f32 %v382
        %v447 = vcvt.s32.f32 %v383
        %v448 = vcvt.s32.f32 %v384
        %v449 = vcvt.s32.f32 %v385
        %v450 = vcvt.s32.f32 %v386
        %v451 = vcvt.s32.f32 %v387
        %v452 = vcvt.s32.f32 %v388
        %v453 = vcvt.s32.f32 %v389
        %v454 = vcvt.s32.f32 %v390
        %v455 = vcvt.s32.f32 %v391
        %v456 = vcvt.s32.f32 %v392
        %v457 = vcvt.s32.f32 %v393
        %v458 = vcvt.s32.f32 %v394
        %v459 = vpack.c.bf16 %v397, %v395
        %v460 = vpack.c.bf16 %v398, %v396
        %v461 = vpack.c.bf16 %v401, %v399
        %v462 = vpack.c.bf16 %v402, %v400
        %v463 = vpack.c.bf16 %v405, %v403
        %v464 = vpack.c.bf16 %v406, %v404
        %v465 = vpack.c.bf16 %v409, %v407
        %v466 = vpack.c.bf16 %v410, %v408
        %v467 = vpack.c.bf16 %v413, %v411
        %v468 = vpack.c.bf16 %v414, %v412
        %v469 = vpack.c.bf16 %v417, %v415
        %v470 = vpack.c.bf16 %v418, %v416
        %v471 = vpack.c.bf16 %v421, %v419
        %v472 = vpack.c.bf16 %v422, %v420
        %v473 = vpack.c.bf16 %v425, %v423
        %v474 = vpack.c.bf16 %v426, %v424
        %v475 = vpack.c.bf16 %v429, %v427
        %v476 = vpack.c.bf16 %v430, %v428
        %v477 = vpack.c.bf16 %v433, %v431
        %v478 = vpack.c.bf16 %v434, %v432
        %v479 = vpack.c.bf16 %v437, %v435
        %v480 = vpack.c.bf16 %v438, %v436
        %v481 = vpack.c.bf16 %v441, %v439
        %v482 = vpack.c.bf16 %v442, %v440
        %v483 = vpack.c.bf16 %v445, %v443
        %v484 = vpack.c.bf16 %v446, %v444
        %v485 = vpack.c.bf16 %v449, %v447
        %v486 = vpack.c.bf16 %v450, %v448
        %v487 = vpack.c.bf16 %v453, %v451
        %v488 = vpack.c.bf16 %v454, %v452
        %v489 = vpack.c.bf16 %v457, %v455
        %v490 = vpack.c.bf16 %v458, %v456
        %v491 = vld [vmem:[#allocation2] sm:$0xff]
        %v492 = vld [vmem:[#allocation2 + $0x8] sm:$0xff]
        %v493 = vld [vmem:[#allocation2 + $0x10] sm:$0xff]
        %v494 = vld [vmem:[#allocation2 + $0x18] sm:$0xff]
        %v495 = vld [vmem:[#allocation2 + $0x20] sm:$0xff]
        %v496 = vld [vmem:[#allocation2 + $0x28] sm:$0xff]
        %v497 = vld [vmem:[#allocation2 + $0x30] sm:$0xff]
        %v498 = vld [vmem:[#allocation2 + $0x38] sm:$0xff]
        %v499 = vld [vmem:[#allocation2 + $0x40] sm:$0xff]
        %v500 = vld [vmem:[#allocation2 + $0x48] sm:$0xff]
        %v501 = vld [vmem:[#allocation2 + $0x50] sm:$0xff]
        %v502 = vld [vmem:[#allocation2 + $0x58] sm:$0xff]
        %v503 = vld [vmem:[#allocation2 + $0x60] sm:$0xff]
        %v504 = vld [vmem:[#allocation2 + $0x68] sm:$0xff]
        %v505 = vld [vmem:[#allocation2 + $0x70] sm:$0xff]
        %v506 = vld [vmem:[#allocation2 + $0x78] sm:$0xff]
        %v507 = vld [vmem:[#allocation2 + $0x80] sm:$0xff]
        %v508 = vld [vmem:[#allocation2 + $0x88] sm:$0xff]
        %v509 = vld [vmem:[#allocation2 + $0x90] sm:$0xff]
        %v510 = vld [vmem:[#allocation2 + $0x98] sm:$0xff]
        %v511 = vld [vmem:[#allocation2 + $0xa0] sm:$0xff]
        %v512 = vld [vmem:[#allocation2 + $0xa8] sm:$0xff]
        %v513 = vld [vmem:[#allocation2 + $0xb0] sm:$0xff]
        %v514 = vld [vmem:[#allocation2 + $0xb8] sm:$0xff]
        %v515 = vld [vmem:[#allocation2 + $0xc0] sm:$0xff]
        %v516 = vld [vmem:[#allocation2 + $0xc8] sm:$0xff]
        %v517 = vld [vmem:[#allocation2 + $0xd0] sm:$0xff]
        %v518 = vld [vmem:[#allocation2 + $0xd8] sm:$0xff]
        %v519 = vld [vmem:[#allocation2 + $0xe0] sm:$0xff]
        %v520 = vld [vmem:[#allocation2 + $0xe8] sm:$0xff]
        %v521 = vld [vmem:[#allocation2 + $0xf0] sm:$0xff]
        %v522 = vld [vmem:[#allocation2 + $0xf8] sm:$0xff]
        %523 = vmatprep.subr.bf16.mxu0 0
        %524 = vmatpush1.bf16.msra.mxu0 1065369472
        %525 = vmatprep.subr.bf16.mxu0 0
        %526 = vmatpush1.bf16.msra.mxu0 1065369472
        %527 = vmatprep.subr.bf16.mxu0 0
        %528 = vmatpush1.bf16.msra.mxu0 1065369472
        %529 = vmatprep.subr.bf16.mxu0 0
        %530 = vmatpush1.bf16.msra.mxu0 1065369472
        %531 = vmatprep.subr.bf16.mxu0 0
        %532 = vmatpush1.bf16.msra.mxu0 1065369472
        %533 = vmatprep.subr.bf16.mxu0 0
        %534 = vmatpush1.bf16.msra.mxu0 1065369472
        %535 = vmatprep.subr.bf16.mxu0 0
        %536 = vmatpush1.bf16.msra.mxu0 1065369472
        %537 = vmatprep.subr.bf16.mxu0 0
        %538 = vmatpush1.bf16.msra.mxu0 1065369472
        %539 = vmatprep.subr.bf16.mxu0 0
        %540 = vmatpush2.bf16.msra.mxu0 1065369472
        %541 = vmatprep.subr.bf16.mxu0 0
        %542 = vmatpush2.bf16.msra.mxu0 1065369472
        %543 = vmatprep.subr.bf16.mxu0 0
        %544 = vmatpush2.bf16.msra.mxu0 1065369472
        %545 = vmatprep.subr.bf16.mxu0 0
        %546 = vmatpush2.bf16.msra.mxu0 1065369472
        %547 = vmatprep.subr.bf16.mxu0 0
        %548 = vmatpush2.bf16.msra.mxu0 1065369472
        %549 = vmatprep.subr.bf16.mxu0 0
        %550 = vmatpush2.bf16.msra.mxu0 1065369472
        %551 = vmatprep.subr.bf16.mxu0 0
        %552 = vmatpush2.bf16.msra.mxu0 1065369472
        %553 = vmatprep.subr.bf16.mxu0 0
        %554 = vmatpush2.bf16.msra.mxu0 1065369472
        %555 = vmatprep.mubr.bf16.mxu0 %v460
        %556 = vmatmul.mubr.bf16.gmra.mxu0 %v459
        %v557 = vpop.f32.mrf.mxu0
        %v558 = vadd.f32 0.0, %v557
        %v559 = vpop.f32.mrf.mxu0
        %v560 = vpop.f32.mrf.mxu0
        %v561 = vadd.f32 0.0, %v560
        %v562 = vpop.f32.mrf.mxu0
        %563 = vmatprep.mubr.bf16.mxu0 %v462
        %564 = vmatmul.mubr.bf16.gmra.mxu0 %v461
        %v565 = vpop.f32.mrf.mxu0
        %v566 = vadd.f32 0.0, %v565
        %v567 = vpop.f32.mrf.mxu0
        %v568 = vpop.f32.mrf.mxu0
        %v569 = vadd.f32 0.0, %v568
        %v570 = vpop.f32.mrf.mxu0
        %571 = vmatprep.mubr.bf16.mxu0 %v464
        %572 = vmatmul.mubr.bf16.gmra.mxu0 %v463
        %v573 = vpop.f32.mrf.mxu0
        %v574 = vadd.f32 0.0, %v573
        %v575 = vpop.f32.mrf.mxu0
        %v576 = vpop.f32.mrf.mxu0
        %v577 = vadd.f32 0.0, %v576
        %v578 = vpop.f32.mrf.mxu0
        %579 = vmatprep.mubr.bf16.mxu0 %v466
        %580 = vmatmul.mubr.bf16.gmra.mxu0 %v465
        %v581 = vpop.f32.mrf.mxu0
        %v582 = vadd.f32 0.0, %v581
        %v583 = vpop.f32.mrf.mxu0
        %v584 = vpop.f32.mrf.mxu0
        %v585 = vadd.f32 0.0, %v584
        %v586 = vpop.f32.mrf.mxu0
        %587 = vmatprep.mubr.bf16.mxu0 %v468
        %588 = vmatmul.mubr.bf16.gmra.mxu0 %v467
        %v589 = vpop.f32.mrf.mxu0
        %v590 = vadd.f32 0.0, %v589
        %v591 = vpop.f32.mrf.mxu0
        %v592 = vpop.f32.mrf.mxu0
        %v593 = vadd.f32 0.0, %v592
        %v594 = vpop.f32.mrf.mxu0
        %595 = vmatprep.mubr.bf16.mxu0 %v470
        %596 = vmatmul.mubr.bf16.gmra.mxu0 %v469
        %v597 = vpop.f32.mrf.mxu0
        %v598 = vadd.f32 0.0, %v597
        %v599 = vpop.f32.mrf.mxu0
        %v600 = vpop.f32.mrf.mxu0
        %v601 = vadd.f32 0.0, %v600
        %v602 = vpop.f32.mrf.mxu0
        %603 = vmatprep.mubr.bf16.mxu0 %v472
        %604 = vmatmul.mubr.bf16.gmra.mxu0 %v471
        %v605 = vpop.f32.mrf.mxu0
        %v606 = vadd.f32 0.0, %v605
        %v607 = vpop.f32.mrf.mxu0
        %v608 = vpop.f32.mrf.mxu0
        %v609 = vadd.f32 0.0, %v608
        %v610 = vpop.f32.mrf.mxu0
        %611 = vmatprep.mubr.bf16.mxu0 %v474
        %612 = vmatmul.mubr.bf16.gmra.mxu0 %v473
        %v613 = vpop.f32.mrf.mxu0
        %v614 = vadd.f32 0.0, %v613
        %v615 = vpop.f32.mrf.mxu0
        %v616 = vpop.f32.mrf.mxu0
        %v617 = vadd.f32 0.0, %v616
        %v618 = vpop.f32.mrf.mxu0
        %619 = vmatprep.mubr.bf16.mxu0 %v476
        %620 = vmatmul.mubr.bf16.gmra.mxu0 %v475
        %v621 = vpop.f32.mrf.mxu0
        %v622 = vadd.f32 0.0, %v621
        %v623 = vpop.f32.mrf.mxu0
        %v624 = vpop.f32.mrf.mxu0
        %v625 = vadd.f32 0.0, %v624
        %v626 = vpop.f32.mrf.mxu0
        %627 = vmatprep.mubr.bf16.mxu0 %v478
        %628 = vmatmul.mubr.bf16.gmra.mxu0 %v477
        %v629 = vpop.f32.mrf.mxu0
        %v630 = vadd.f32 0.0, %v629
        %v631 = vpop.f32.mrf.mxu0
        %v632 = vpop.f32.mrf.mxu0
        %v633 = vadd.f32 0.0, %v632
        %v634 = vpop.f32.mrf.mxu0
        %635 = vmatprep.mubr.bf16.mxu0 %v480
        %636 = vmatmul.mubr.bf16.gmra.mxu0 %v479
        %v637 = vpop.f32.mrf.mxu0
        %v638 = vadd.f32 0.0, %v637
        %v639 = vpop.f32.mrf.mxu0
        %v640 = vpop.f32.mrf.mxu0
        %v641 = vadd.f32 0.0, %v640
        %v642 = vpop.f32.mrf.mxu0
        %643 = vmatprep.mubr.bf16.mxu0 %v482
        %644 = vmatmul.mubr.bf16.gmra.mxu0 %v481
        %v645 = vpop.f32.mrf.mxu0
        %v646 = vadd.f32 0.0, %v645
        %v647 = vpop.f32.mrf.mxu0
        %v648 = vpop.f32.mrf.mxu0
        %v649 = vadd.f32 0.0, %v648
        %v650 = vpop.f32.mrf.mxu0
        %651 = vmatprep.mubr.bf16.mxu0 %v484
        %652 = vmatmul.mubr.bf16.gmra.mxu0 %v483
        %v653 = vpop.f32.mrf.mxu0
        %v654 = vadd.f32 0.0, %v653
        %v655 = vpop.f32.mrf.mxu0
        %v656 = vpop.f32.mrf.mxu0
        %v657 = vadd.f32 0.0, %v656
        %v658 = vpop.f32.mrf.mxu0
        %659 = vmatprep.mubr.bf16.mxu0 %v486
        %660 = vmatmul.mubr.bf16.gmra.mxu0 %v485
        %v661 = vpop.f32.mrf.mxu0
        %v662 = vadd.f32 0.0, %v661
        %v663 = vpop.f32.mrf.mxu0
        %v664 = vpop.f32.mrf.mxu0
        %v665 = vadd.f32 0.0, %v664
        %v666 = vpop.f32.mrf.mxu0
        %667 = vmatprep.mubr.bf16.mxu0 %v488
        %668 = vmatmul.mubr.bf16.gmra.mxu0 %v487
        %v669 = vpop.f32.mrf.mxu0
        %v670 = vadd.f32 0.0, %v669
        %v671 = vpop.f32.mrf.mxu0
        %v672 = vpop.f32.mrf.mxu0
        %v673 = vadd.f32 0.0, %v672
        %v674 = vpop.f32.mrf.mxu0
        %675 = vmatprep.mubr.bf16.mxu0 %v490
        %676 = vmatmul.mubr.bf16.gmra.mxu0 %v489
        %v677 = vpop.f32.mrf.mxu0
        %v678 = vadd.f32 0.0, %v677
        %v679 = vpop.f32.mrf.mxu0
        %v680 = vpop.f32.mrf.mxu0
        %v681 = vadd.f32 0.0, %v680
        %v682 = vpop.f32.mrf.mxu0
        %683 = vdwg.mxu0
        %v684 = vadd.f32 %v491, %v558
        %v685 = vadd.f32 %v492, %v561
        %v686 = vadd.f32 %v493, %v566
        %v687 = vadd.f32 %v494, %v569
        %v688 = vadd.f32 %v495, %v574
        %v689 = vadd.f32 %v496, %v577
        %v690 = vadd.f32 %v497, %v582
        %v691 = vadd.f32 %v498, %v585
        %v692 = vadd.f32 %v499, %v590
        %v693 = vadd.f32 %v500, %v593
        %v694 = vadd.f32 %v501, %v598
        %v695 = vadd.f32 %v502, %v601
        %v696 = vadd.f32 %v503, %v606
        %v697 = vadd.f32 %v504, %v609
        %v698 = vadd.f32 %v505, %v614
        %v699 = vadd.f32 %v506, %v617
        %v700 = vadd.f32 %v507, %v622
        %v701 = vadd.f32 %v508, %v625
        %v702 = vadd.f32 %v509, %v630
        %v703 = vadd.f32 %v510, %v633
        %v704 = vadd.f32 %v511, %v638
        %v705 = vadd.f32 %v512, %v641
        %v706 = vadd.f32 %v513, %v646
        %v707 = vadd.f32 %v514, %v649
        %v708 = vadd.f32 %v515, %v654
        %v709 = vadd.f32 %v516, %v657
        %v710 = vadd.f32 %v517, %v662
        %v711 = vadd.f32 %v518, %v665
        %v712 = vadd.f32 %v519, %v670
        %v713 = vadd.f32 %v520, %v673
        %v714 = vadd.f32 %v521, %v678
        %v715 = vadd.f32 %v522, %v681
        %vm716 = vcmask 7168
        %717 = vst.msk [vmem:[#allocation2] sm:$0xff] %vm716, %v684
        %718 = vst.msk [vmem:[#allocation2 + $0x8] sm:$0xff] %vm716, %v685
        %719 = vst.msk [vmem:[#allocation2 + $0x10] sm:$0xff] %vm716, %v686
        %720 = vst.msk [vmem:[#allocation2 + $0x18] sm:$0xff] %vm716, %v687
        %721 = vst.msk [vmem:[#allocation2 + $0x20] sm:$0xff] %vm716, %v688
        %722 = vst.msk [vmem:[#allocation2 + $0x28] sm:$0xff] %vm716, %v689
        %723 = vst.msk [vmem:[#allocation2 + $0x30] sm:$0xff] %vm716, %v690
        %724 = vst.msk [vmem:[#allocation2 + $0x38] sm:$0xff] %vm716, %v691
        %725 = vst.msk [vmem:[#allocation2 + $0x40] sm:$0xff] %vm716, %v692
        %726 = vst.msk [vmem:[#allocation2 + $0x48] sm:$0xff] %vm716, %v693
        %727 = vst.msk [vmem:[#allocation2 + $0x50] sm:$0xff] %vm716, %v694
        %728 = vst.msk [vmem:[#allocation2 + $0x58] sm:$0xff] %vm716, %v695
        %729 = vst.msk [vmem:[#allocation2 + $0x60] sm:$0xff] %vm716, %v696
        %730 = vst.msk [vmem:[#allocation2 + $0x68] sm:$0xff] %vm716, %v697
        %731 = vst.msk [vmem:[#allocation2 + $0x70] sm:$0xff] %vm716, %v698
        %732 = vst.msk [vmem:[#allocation2 + $0x78] sm:$0xff] %vm716, %v699
        %733 = vst.msk [vmem:[#allocation2 + $0x80] sm:$0xff] %vm716, %v700
        %734 = vst.msk [vmem:[#allocation2 + $0x88] sm:$0xff] %vm716, %v701
        %735 = vst.msk [vmem:[#allocation2 + $0x90] sm:$0xff] %vm716, %v702
        %736 = vst.msk [vmem:[#allocation2 + $0x98] sm:$0xff] %vm716, %v703
        %737 = vst.msk [vmem:[#allocation2 + $0xa0] sm:$0xff] %vm716, %v704
        %738 = vst.msk [vmem:[#allocation2 + $0xa8] sm:$0xff] %vm716, %v705
        %739 = vst.msk [vmem:[#allocation2 + $0xb0] sm:$0xff] %vm716, %v706
        %740 = vst.msk [vmem:[#allocation2 + $0xb8] sm:$0xff] %vm716, %v707
        %741 = vst.msk [vmem:[#allocation2 + $0xc0] sm:$0xff] %vm716, %v708
        %742 = vst.msk [vmem:[#allocation2 + $0xc8] sm:$0xff] %vm716, %v709
        %743 = vst.msk [vmem:[#allocation2 + $0xd0] sm:$0xff] %vm716, %v710
        %744 = vst.msk [vmem:[#allocation2 + $0xd8] sm:$0xff] %vm716, %v711
        %745 = vst.msk [vmem:[#allocation2 + $0xe0] sm:$0xff] %vm716, %v712
        %746 = vst.msk [vmem:[#allocation2 + $0xe8] sm:$0xff] %vm716, %v713
        %747 = vst.msk [vmem:[#allocation2 + $0xf0] sm:$0xff] %vm716, %v714
        %748 = vst.msk [vmem:[#allocation2 + $0xf8] sm:$0xff] %vm716, %v715
        // Predicated region
        $region33: #{tpu_custom_call.1} parent=23 // pred_check
          %p749 = pneg %p153
        $region34: #{tpu_custom_call.1} parent=23 // pred_check_branch
          %751 = sbr.rel (%p749) target = $region36
        $region35: #{tpu_custom_call.1} parent=23 // pred_region
          %v752 = vld [vmem:[#allocation2] sm:$0xff]
          %v753 = vld [vmem:[#allocation2 + $0x8] sm:$0xff]
          %v754 = vld [vmem:[#allocation2 + $0x10] sm:$0xff]
          %v755 = vld [vmem:[#allocation2 + $0x18] sm:$0xff]
          %v756 = vld [vmem:[#allocation2 + $0x20] sm:$0xff]
          %v757 = vld [vmem:[#allocation2 + $0x28] sm:$0xff]
          %v758 = vld [vmem:[#allocation2 + $0x30] sm:$0xff]
          %v759 = vld [vmem:[#allocation2 + $0x38] sm:$0xff]
          %v760 = vld [vmem:[#allocation2 + $0x40] sm:$0xff]
          %v761 = vld [vmem:[#allocation2 + $0x48] sm:$0xff]
          %v762 = vld [vmem:[#allocation2 + $0x50] sm:$0xff]
          %v763 = vld [vmem:[#allocation2 + $0x58] sm:$0xff]
          %v764 = vld [vmem:[#allocation2 + $0x60] sm:$0xff]
          %v765 = vld [vmem:[#allocation2 + $0x68] sm:$0xff]
          %v766 = vld [vmem:[#allocation2 + $0x70] sm:$0xff]
          %v767 = vld [vmem:[#allocation2 + $0x78] sm:$0xff]
          %v768 = vld [vmem:[#allocation2 + $0x80] sm:$0xff]
          %v769 = vld [vmem:[#allocation2 + $0x88] sm:$0xff]
          %v770 = vld [vmem:[#allocation2 + $0x90] sm:$0xff]
          %v771 = vld [vmem:[#allocation2 + $0x98] sm:$0xff]
          %v772 = vld [vmem:[#allocation2 + $0xa0] sm:$0xff]
          %v773 = vld [vmem:[#allocation2 + $0xa8] sm:$0xff]
          %v774 = vld [vmem:[#allocation2 + $0xb0] sm:$0xff]
          %v775 = vld [vmem:[#allocation2 + $0xb8] sm:$0xff]
          %v776 = vld [vmem:[#allocation2 + $0xc0] sm:$0xff]
          %v777 = vld [vmem:[#allocation2 + $0xc8] sm:$0xff]
          %v778 = vld [vmem:[#allocation2 + $0xd0] sm:$0xff]
          %v779 = vld [vmem:[#allocation2 + $0xd8] sm:$0xff]
          %v780 = vld [vmem:[#allocation2 + $0xe0] sm:$0xff]
          %v781 = vld [vmem:[#allocation2 + $0xe8] sm:$0xff]
          %v782 = vld [vmem:[#allocation2 + $0xf0] sm:$0xff]
          %v783 = vld [vmem:[#allocation2 + $0xf8] sm:$0xff]
          %vm784 = vcmp.gt.f32.partialorder %v752, 0.0
          %vm785 = vcmp.gt.f32.partialorder %v753, 0.0
          %vm786 = vcmp.gt.f32.partialorder %v754, 0.0
          %vm787 = vcmp.gt.f32.partialorder %v755, 0.0
          %vm788 = vcmp.gt.f32.partialorder %v756, 0.0
          %vm789 = vcmp.gt.f32.partialorder %v757, 0.0
          %vm790 = vcmp.gt.f32.partialorder %v758, 0.0
          %vm791 = vcmp.gt.f32.partialorder %v759, 0.0
          %vm792 = vcmp.gt.f32.partialorder %v760, 0.0
          %vm793 = vcmp.gt.f32.partialorder %v761, 0.0
          %vm794 = vcmp.gt.f32.partialorder %v762, 0.0
          %vm795 = vcmp.gt.f32.partialorder %v763, 0.0
          %vm796 = vcmp.gt.f32.partialorder %v764, 0.0
          %vm797 = vcmp.gt.f32.partialorder %v765, 0.0
          %vm798 = vcmp.gt.f32.partialorder %v766, 0.0
          %vm799 = vcmp.gt.f32.partialorder %v767, 0.0
          %vm800 = vcmp.gt.f32.partialorder %v768, 0.0
          %vm801 = vcmp.gt.f32.partialorder %v769, 0.0
          %vm802 = vcmp.gt.f32.partialorder %v770, 0.0
          %vm803 = vcmp.gt.f32.partialorder %v771, 0.0
          %vm804 = vcmp.gt.f32.partialorder %v772, 0.0
          %vm805 = vcmp.gt.f32.partialorder %v773, 0.0
          %vm806 = vcmp.gt.f32.partialorder %v774, 0.0
          %vm807 = vcmp.gt.f32.partialorder %v775, 0.0
          %vm808 = vcmp.gt.f32.partialorder %v776, 0.0
          %vm809 = vcmp.gt.f32.partialorder %v777, 0.0
          %vm810 = vcmp.gt.f32.partialorder %v778, 0.0
          %vm811 = vcmp.gt.f32.partialorder %v779, 0.0
          %vm812 = vcmp.gt.f32.partialorder %v780, 0.0
          %vm813 = vcmp.gt.f32.partialorder %v781, 0.0
          %vm814 = vcmp.gt.f32.partialorder %v782, 0.0
          %vm815 = vcmp.gt.f32.partialorder %v783, 0.0
          %v816 = vsel %vm784, %v224, -1.0
          %v817 = vsel %vm785, %v225, -1.0
          %v818 = vsel %vm786, %v226, -1.0
          %v819 = vsel %vm787, %v227, -1.0
          %v820 = vsel %vm788, %v228, -1.0
          %v821 = vsel %vm789, %v229, -1.0
          %v822 = vsel %vm790, %v230, -1.0
          %v823 = vsel %vm791, %v231, -1.0
          %v824 = vsel %vm792, %v232, -1.0
          %v825 = vsel %vm793, %v233, -1.0
          %v826 = vsel %vm794, %v234, -1.0
          %v827 = vsel %vm795, %v235, -1.0
          %v828 = vsel %vm796, %v236, -1.0
          %v829 = vsel %vm797, %v237, -1.0
          %v830 = vsel %vm798, %v238, -1.0
          %v831 = vsel %vm799, %v239, -1.0
          %v832 = vsel %vm800, %v240, -1.0
          %v833 = vsel %vm801, %v241, -1.0
          %v834 = vsel %vm802, %v242, -1.0
          %v835 = vsel %vm803, %v243, -1.0
          %v836 = vsel %vm804, %v244, -1.0
          %v837 = vsel %vm805, %v245, -1.0
          %v838 = vsel %vm806, %v246, -1.0
          %v839 = vsel %vm807, %v247, -1.0
          %v840 = vsel %vm808, %v248, -1.0
          %v841 = vsel %vm809, %v249, -1.0
          %v842 = vsel %vm810, %v250, -1.0
          %v843 = vsel %vm811, %v251, -1.0
          %v844 = vsel %vm812, %v252, -1.0
          %v845 = vsel %vm813, %v253, -1.0
          %v846 = vsel %vm814, %v254, -1.0
          %v847 = vsel %vm815, %v255, -1.0
          %v848 = vsel %vm716, %v816, -inf
          %v849 = vsel %vm716, %v817, -inf
          %v850 = vsel %vm716, %v818, -inf
          %v851 = vsel %vm716, %v819, -inf
          %v852 = vsel %vm716, %v820, -inf
          %v853 = vmax.f32 %v848, %v852
          %v854 = vsel %vm716, %v821, -inf
          %v855 = vmax.f32 %v849, %v854
          %v856 = vsel %vm716, %v822, -inf
          %v857 = vmax.f32 %v850, %v856
          %v858 = vsel %vm716, %v823, -inf
          %v859 = vmax.f32 %v851, %v858
          %v860 = vsel %vm716, %v824, -inf
          %v861 = vmax.f32 %v853, %v860
          %v862 = vsel %vm716, %v825, -inf
          %v863 = vmax.f32 %v855, %v862
          %v864 = vsel %vm716, %v826, -inf
          %v865 = vmax.f32 %v857, %v864
          %v866 = vsel %vm716, %v827, -inf
          %v867 = vmax.f32 %v859, %v866
          %v868 = vsel %vm716, %v828, -inf
          %v869 = vmax.f32 %v861, %v868
          %v870 = vsel %vm716, %v829, -inf
          %v871 = vmax.f32 %v863, %v870
          %v872 = vsel %vm716, %v830, -inf
          %v873 = vmax.f32 %v865, %v872
          %v874 = vsel %vm716, %v831, -inf
          %v875 = vmax.f32 %v867, %v874
          %v876 = vsel %vm716, %v832, -inf
          %v877 = vmax.f32 %v869, %v876
          %v878 = vsel %vm716, %v833, -inf
          %v879 = vmax.f32 %v871, %v878
          %v880 = vsel %vm716, %v834, -inf
          %v881 = vmax.f32 %v873, %v880
          %v882 = vsel %vm716, %v835, -inf
          %v883 = vmax.f32 %v875, %v882
          %v884 = vsel %vm716, %v836, -inf
          %v885 = vmax.f32 %v877, %v884
          %v886 = vsel %vm716, %v837, -inf
          %v887 = vmax.f32 %v879, %v886
          %v888 = vsel %vm716, %v838, -inf
          %v889 = vmax.f32 %v881, %v888
          %v890 = vsel %vm716, %v839, -inf
          %v891 = vmax.f32 %v883, %v890
          %v892 = vsel %vm716, %v840, -inf
          %v893 = vmax.f32 %v885, %v892
          %v894 = vsel %vm716, %v841, -inf
          %v895 = vmax.f32 %v887, %v894
          %v896 = vsel %vm716, %v842, -inf
          %v897 = vmax.f32 %v889, %v896
          %v898 = vsel %vm716, %v843, -inf
          %v899 = vmax.f32 %v891, %v898
          %v900 = vsel %vm716, %v844, -inf
          %v901 = vmax.f32 %v893, %v900
          %v902 = vsel %vm716, %v845, -inf
          %v903 = vmax.f32 %v895, %v902
          %v904 = vsel %vm716, %v846, -inf
          %v905 = vmax.f32 %v897, %v904
          %v906 = vsel %vm716, %v847, -inf
          %v907 = vmax.f32 %v899, %v906
          %v908 = vmax.f32 %v901, %v903
          %v909 = vmax.f32 %v905, %v907
          %v910 = vmax.f32 %v908, %v909
          %v911 = vrot.slane %v910, 4
          %v912 = vmax.f32 %v910, %v911
          %v913 = vrot.slane %v912, 2
          %v914 = vmax.f32 %v912, %v913
          %v915 = vrot.slane %v914, 1
          %v916 = vmax.f32 %v914, %v915
          %vm917 = vcmp.eq.f32.partialorder %v224, %v916
          %vm918 = vcmp.eq.f32.partialorder %v225, %v916
          %vm919 = vcmp.eq.f32.partialorder %v226, %v916
          %vm920 = vcmp.eq.f32.partialorder %v227, %v916
          %vm921 = vcmp.eq.f32.partialorder %v228, %v916
          %vm922 = vcmp.eq.f32.partialorder %v229, %v916
          %vm923 = vcmp.eq.f32.partialorder %v230, %v916
          %vm924 = vcmp.eq.f32.partialorder %v231, %v916
          %vm925 = vcmp.eq.f32.partialorder %v232, %v916
          %vm926 = vcmp.eq.f32.partialorder %v233, %v916
          %vm927 = vcmp.eq.f32.partialorder %v234, %v916
          %vm928 = vcmp.eq.f32.partialorder %v235, %v916
          %vm929 = vcmp.eq.f32.partialorder %v236, %v916
          %vm930 = vcmp.eq.f32.partialorder %v237, %v916
          %vm931 = vcmp.eq.f32.partialorder %v238, %v916
          %vm932 = vcmp.eq.f32.partialorder %v239, %v916
          %vm933 = vcmp.eq.f32.partialorder %v240, %v916
          %vm934 = vcmp.eq.f32.partialorder %v241, %v916
          %vm935 = vcmp.eq.f32.partialorder %v242, %v916
          %vm936 = vcmp.eq.f32.partialorder %v243, %v916
          %vm937 = vcmp.eq.f32.partialorder %v244, %v916
          %vm938 = vcmp.eq.f32.partialorder %v245, %v916
          %vm939 = vcmp.eq.f32.partialorder %v246, %v916
          %vm940 = vcmp.eq.f32.partialorder %v247, %v916
          %vm941 = vcmp.eq.f32.partialorder %v248, %v916
          %vm942 = vcmp.eq.f32.partialorder %v249, %v916
          %vm943 = vcmp.eq.f32.partialorder %v250, %v916
          %vm944 = vcmp.eq.f32.partialorder %v251, %v916
          %vm945 = vcmp.eq.f32.partialorder %v252, %v916
          %vm946 = vcmp.eq.f32.partialorder %v253, %v916
          %vm947 = vcmp.eq.f32.partialorder %v254, %v916
          %vm948 = vcmp.eq.f32.partialorder %v255, %v916
          %v949 = vsel %vm917, %v752, 0.0
          %v950 = vsel %vm918, %v753, 0.0
          %v951 = vsel %vm919, %v754, 0.0
          %v952 = vsel %vm920, %v755, 0.0
          %v953 = vsel %vm921, %v756, 0.0
          %v954 = vsel %vm922, %v757, 0.0
          %v955 = vsel %vm923, %v758, 0.0
          %v956 = vsel %vm924, %v759, 0.0
          %v957 = vsel %vm925, %v760, 0.0
          %v958 = vsel %vm926, %v761, 0.0
          %v959 = vsel %vm927, %v762, 0.0
          %v960 = vsel %vm928, %v763, 0.0
          %v961 = vsel %vm929, %v764, 0.0
          %v962 = vsel %vm930, %v765, 0.0
          %v963 = vsel %vm931, %v766, 0.0
          %v964 = vsel %vm932, %v767, 0.0
          %v965 = vsel %vm933, %v768, 0.0
          %v966 = vsel %vm934, %v769, 0.0
          %v967 = vsel %vm935, %v770, 0.0
          %v968 = vsel %vm936, %v771, 0.0
          %v969 = vsel %vm937, %v772, 0.0
          %v970 = vsel %vm938, %v773, 0.0
          %v971 = vsel %vm939, %v774, 0.0
          %v972 = vsel %vm940, %v775, 0.0
          %v973 = vsel %vm941, %v776, 0.0
          %v974 = vsel %vm942, %v777, 0.0
          %v975 = vsel %vm943, %v778, 0.0
          %v976 = vsel %vm944, %v779, 0.0
          %v977 = vsel %vm945, %v780, 0.0
          %v978 = vsel %vm946, %v781, 0.0
          %v979 = vsel %vm947, %v782, 0.0
          %v980 = vsel %vm948, %v783, 0.0
          %v981 = vsel %vm716, %v949, 0.0
          %v982 = vsel %vm716, %v950, 0.0
          %v983 = vadd.f32 %v981, %v982
          %v984 = vsel %vm716, %v951, 0.0
          %v985 = vadd.f32 %v983, %v984
          %v986 = vsel %vm716, %v952, 0.0
          %v987 = vadd.f32 %v985, %v986
          %v988 = vsel %vm716, %v953, 0.0
          %v989 = vadd.f32 %v987, %v988
          %v990 = vsel %vm716, %v954, 0.0
          %v991 = vadd.f32 %v989, %v990
          %v992 = vsel %vm716, %v955, 0.0
          %v993 = vadd.f32 %v991, %v992
          %v994 = vsel %vm716, %v956, 0.0
          %v995 = vadd.f32 %v993, %v994
          %v996 = vsel %vm716, %v957, 0.0
          %v997 = vadd.f32 %v995, %v996
          %v998 = vsel %vm716, %v958, 0.0
          %v999 = vadd.f32 %v997, %v998
          %v1000 = vsel %vm716, %v959, 0.0
          %v1001 = vadd.f32 %v999, %v1000
          %v1002 = vsel %vm716, %v960, 0.0
          %v1003 = vadd.f32 %v1001, %v1002
          %v1004 = vsel %vm716, %v961, 0.0
          %v1005 = vadd.f32 %v1003, %v1004
          %v1006 = vsel %vm716, %v962, 0.0
          %v1007 = vadd.f32 %v1005, %v1006
          %v1008 = vsel %vm716, %v963, 0.0
          %v1009 = vadd.f32 %v1007, %v1008
          %v1010 = vsel %vm716, %v964, 0.0
          %v1011 = vadd.f32 %v1009, %v1010
          %v1012 = vsel %vm716, %v965, 0.0
          %v1013 = vadd.f32 %v1011, %v1012
          %v1014 = vsel %vm716, %v966, 0.0
          %v1015 = vadd.f32 %v1013, %v1014
          %v1016 = vsel %vm716, %v967, 0.0
          %v1017 = vadd.f32 %v1015, %v1016
          %v1018 = vsel %vm716, %v968, 0.0
          %v1019 = vadd.f32 %v1017, %v1018
          %v1020 = vsel %vm716, %v969, 0.0
          %v1021 = vadd.f32 %v1019, %v1020
          %v1022 = vsel %vm716, %v970, 0.0
          %v1023 = vadd.f32 %v1021, %v1022
          %v1024 = vsel %vm716, %v971, 0.0
          %v1025 = vadd.f32 %v1023, %v1024
          %v1026 = vsel %vm716, %v972, 0.0
          %v1027 = vadd.f32 %v1025, %v1026
          %v1028 = vsel %vm716, %v973, 0.0
          %v1029 = vadd.f32 %v1027, %v1028
          %v1030 = vsel %vm716, %v974, 0.0
          %v1031 = vadd.f32 %v1029, %v1030
          %v1032 = vsel %vm716, %v975, 0.0
          %v1033 = vadd.f32 %v1031, %v1032
          %v1034 = vsel %vm716, %v976, 0.0
          %v1035 = vadd.f32 %v1033, %v1034
          %v1036 = vsel %vm716, %v977, 0.0
          %v1037 = vadd.f32 %v1035, %v1036
          %v1038 = vsel %vm716, %v978, 0.0
          %v1039 = vadd.f32 %v1037, %v1038
          %v1040 = vsel %vm716, %v979, 0.0
          %v1041 = vadd.f32 %v1039, %v1040
          %v1042 = vsel %vm716, %v980, 0.0
          %v1043 = vadd.f32 %v1041, %v1042
          %v1044 = vrot.slane %v1043, 4
          %v1045 = vadd.f32 %v1043, %v1044
          %v1046 = vrot.slane %v1045, 2
          %v1047 = vadd.f32 %v1045, %v1046
          %v1048 = vrot.slane %v1047, 1
          %v1049 = vadd.f32 %v1047, %v1048
          %v1050 = vsel %vm716, %v752, 0.0
          %v1051 = vsel %vm716, %v753, 0.0
          %v1052 = vadd.f32 %v1050, %v1051
          %v1053 = vsel %vm716, %v754, 0.0
          %v1054 = vadd.f32 %v1052, %v1053
          %v1055 = vsel %vm716, %v755, 0.0
          %v1056 = vadd.f32 %v1054, %v1055
          %v1057 = vsel %vm716, %v756, 0.0
          %v1058 = vadd.f32 %v1056, %v1057
          %v1059 = vsel %vm716, %v757, 0.0
          %v1060 = vadd.f32 %v1058, %v1059
          %v1061 = vsel %vm716, %v758, 0.0
          %v1062 = vadd.f32 %v1060, %v1061
          %v1063 = vsel %vm716, %v759, 0.0
          %v1064 = vadd.f32 %v1062, %v1063
          %v1065 = vsel %vm716, %v760, 0.0
          %v1066 = vadd.f32 %v1064, %v1065
          %v1067 = vsel %vm716, %v761, 0.0
          %v1068 = vadd.f32 %v1066, %v1067
          %v1069 = vsel %vm716, %v762, 0.0
          %v1070 = vadd.f32 %v1068, %v1069
          %v1071 = vsel %vm716, %v763, 0.0
          %v1072 = vadd.f32 %v1070, %v1071
          %v1073 = vsel %vm716, %v764, 0.0
          %v1074 = vadd.f32 %v1072, %v1073
          %v1075 = vsel %vm716, %v765, 0.0
          %v1076 = vadd.f32 %v1074, %v1075
          %v1077 = vsel %vm716, %v766, 0.0
          %v1078 = vadd.f32 %v1076, %v1077
          %v1079 = vsel %vm716, %v767, 0.0
          %v1080 = vadd.f32 %v1078, %v1079
          %v1081 = vsel %vm716, %v768, 0.0
          %v1082 = vadd.f32 %v1080, %v1081
          %v1083 = vsel %vm716, %v769, 0.0
          %v1084 = vadd.f32 %v1082, %v1083
          %v1085 = vsel %vm716, %v770, 0.0
          %v1086 = vadd.f32 %v1084, %v1085
          %v1087 = vsel %vm716, %v771, 0.0
          %v1088 = vadd.f32 %v1086, %v1087
          %v1089 = vsel %vm716, %v772, 0.0
          %v1090 = vadd.f32 %v1088, %v1089
          %v1091 = vsel %vm716, %v773, 0.0
          %v1092 = vadd.f32 %v1090, %v1091
          %v1093 = vsel %vm716, %v774, 0.0
          %v1094 = vadd.f32 %v1092, %v1093
          %v1095 = vsel %vm716, %v775, 0.0
          %v1096 = vadd.f32 %v1094, %v1095
          %v1097 = vsel %vm716, %v776, 0.0
          %v1098 = vadd.f32 %v1096, %v1097
          %v1099 = vsel %vm716, %v777, 0.0
          %v1100 = vadd.f32 %v1098, %v1099
          %v1101 = vsel %vm716, %v778, 0.0
          %v1102 = vadd.f32 %v1100, %v1101
          %v1103 = vsel %vm716, %v779, 0.0
          %v1104 = vadd.f32 %v1102, %v1103
          %v1105 = vsel %vm716, %v780, 0.0
          %v1106 = vadd.f32 %v1104, %v1105
          %v1107 = vsel %vm716, %v781, 0.0
          %v1108 = vadd.f32 %v1106, %v1107
          %v1109 = vsel %vm716, %v782, 0.0
          %v1110 = vadd.f32 %v1108, %v1109
          %v1111 = vsel %vm716, %v783, 0.0
          %v1112 = vadd.f32 %v1110, %v1111
          %v1113 = vrot.slane %v1112, 4
          %v1114 = vadd.f32 %v1112, %v1113
          %v1115 = vrot.slane %v1114, 2
          %v1116 = vadd.f32 %v1114, %v1115
          %v1117 = vrot.slane %v1116, 1
          %v1118 = vadd.f32 %v1116, %v1117
          %v1119 = vsub.f32 %v1118, %v1049
          %v1120 = vrcp.pop 255.0
          %v1121 = vmul.f32 %v1119, %v1120
          %v1122 = vfloor.f32 %v1121
          %v1123 = vmul.f32 %v1122, 255.0
          %v1124 = vsub.f32 %v1119, %v1123
          %vm1125 = vcmp.ge.f32.partialorder %v1124, 255.0
          %v1126 = vsel %vm1125, 1, 0
          %v1127 = vcvt.s32.f32 %v1126
          %v1128 = vadd.f32 %v1122, %v1127
          %vm1129 = vcmp.lt.f32.partialorder %v1124, 0.0
          %v1130 = vsel %vm1129, 1, 0
          %v1131 = vcvt.s32.f32 %v1130
          %v1132 = vsub.f32 %v1128, %v1131
          %v1133 = vlaneseq
          %v1134 = vand.u32 %v1133, 127
          %v1135 = vadd.s32 %v1134, 128
          %v1136 = vcvt.s32.f32 %v1134
          %v1137 = vcvt.s32.f32 %v1135
          %vm1138 = vcmp.lt.f32.partialorder %v1136, %v224
          %vm1139 = vcmp.lt.f32.partialorder %v1137, %v224
          %vm1140 = vcmp.lt.f32.partialorder %v1136, %v225
          %vm1141 = vcmp.lt.f32.partialorder %v1137, %v225
          %vm1142 = vcmp.lt.f32.partialorder %v1136, %v226
          %vm1143 = vcmp.lt.f32.partialorder %v1137, %v226
          %vm1144 = vcmp.lt.f32.partialorder %v1136, %v227
          %vm1145 = vcmp.lt.f32.partialorder %v1137, %v227
          %vm1146 = vcmp.lt.f32.partialorder %v1136, %v228
          %vm1147 = vcmp.lt.f32.partialorder %v1137, %v228
          %vm1148 = vcmp.lt.f32.partialorder %v1136, %v229
          %vm1149 = vcmp.lt.f32.partialorder %v1137, %v229
          %vm1150 = vcmp.lt.f32.partialorder %v1136, %v230
          %vm1151 = vcmp.lt.f32.partialorder %v1137, %v230
          %vm1152 = vcmp.lt.f32.partialorder %v1136, %v231
          %vm1153 = vcmp.lt.f32.partialorder %v1137, %v231
          %vm1154 = vcmp.lt.f32.partialorder %v1136, %v232
          %vm1155 = vcmp.lt.f32.partialorder %v1137, %v232
          %vm1156 = vcmp.lt.f32.partialorder %v1136, %v233
          %vm1157 = vcmp.lt.f32.partialorder %v1137, %v233
          %vm1158 = vcmp.lt.f32.partialorder %v1136, %v234
          %vm1159 = vcmp.lt.f32.partialorder %v1137, %v234
          %vm1160 = vcmp.lt.f32.partialorder %v1136, %v235
          %vm1161 = vcmp.lt.f32.partialorder %v1137, %v235
          %vm1162 = vcmp.lt.f32.partialorder %v1136, %v236
          %vm1163 = vcmp.lt.f32.partialorder %v1137, %v236
          %vm1164 = vcmp.lt.f32.partialorder %v1136, %v237
          %vm1165 = vcmp.lt.f32.partialorder %v1137, %v237
          %vm1166 = vcmp.lt.f32.partialorder %v1136, %v238
          %vm1167 = vcmp.lt.f32.partialorder %v1137, %v238
          %vm1168 = vcmp.lt.f32.partialorder %v1136, %v239
          %vm1169 = vcmp.lt.f32.partialorder %v1137, %v239
          %vm1170 = vcmp.lt.f32.partialorder %v1136, %v240
          %vm1171 = vcmp.lt.f32.partialorder %v1137, %v240
          %vm1172 = vcmp.lt.f32.partialorder %v1136, %v241
          %vm1173 = vcmp.lt.f32.partialorder %v1137, %v241
          %vm1174 = vcmp.lt.f32.partialorder %v1136, %v242
          %vm1175 = vcmp.lt.f32.partialorder %v1137, %v242
          %vm1176 = vcmp.lt.f32.partialorder %v1136, %v243
          %vm1177 = vcmp.lt.f32.partialorder %v1137, %v243
          %vm1178 = vcmp.lt.f32.partialorder %v1136, %v244
          %vm1179 = vcmp.lt.f32.partialorder %v1137, %v244
          %vm1180 = vcmp.lt.f32.partialorder %v1136, %v245
          %vm1181 = vcmp.lt.f32.partialorder %v1137, %v245
          %vm1182 = vcmp.lt.f32.partialorder %v1136, %v246
          %vm1183 = vcmp.lt.f32.partialorder %v1137, %v246
          %vm1184 = vcmp.lt.f32.partialorder %v1136, %v247
          %vm1185 = vcmp.lt.f32.partialorder %v1137, %v247
          %vm1186 = vcmp.lt.f32.partialorder %v1136, %v248
          %vm1187 = vcmp.lt.f32.partialorder %v1137, %v248
          %vm1188 = vcmp.lt.f32.partialorder %v1136, %v249
          %vm1189 = vcmp.lt.f32.partialorder %v1137, %v249
          %vm1190 = vcmp.lt.f32.partialorder %v1136, %v250
          %vm1191 = vcmp.lt.f32.partialorder %v1137, %v250
          %vm1192 = vcmp.lt.f32.partialorder %v1136, %v251
          %vm1193 = vcmp.lt.f32.partialorder %v1137, %v251
          %vm1194 = vcmp.lt.f32.partialorder %v1136, %v252
          %vm1195 = vcmp.lt.f32.partialorder %v1137, %v252
          %vm1196 = vcmp.lt.f32.partialorder %v1136, %v253
          %vm1197 = vcmp.lt.f32.partialorder %v1137, %v253
          %vm1198 = vcmp.lt.f32.partialorder %v1136, %v254
          %vm1199 = vcmp.lt.f32.partialorder %v1137, %v254
          %vm1200 = vcmp.lt.f32.partialorder %v1136, %v255
          %vm1201 = vcmp.lt.f32.partialorder %v1137, %v255
          %v1202 = vsel %vm1138, 1, 0
          %v1203 = vsel %vm1139, 1, 0
          %v1204 = vsel %vm1140, 1, 0
          %v1205 = vsel %vm1141, 1, 0
          %v1206 = vsel %vm1142, 1, 0
          %v1207 = vsel %vm1143, 1, 0
          %v1208 = vsel %vm1144, 1, 0
          %v1209 = vsel %vm1145, 1, 0
          %v1210 = vsel %vm1146, 1, 0
          %v1211 = vsel %vm1147, 1, 0
          %v1212 = vsel %vm1148, 1, 0
          %v1213 = vsel %vm1149, 1, 0
          %v1214 = vsel %vm1150, 1, 0
          %v1215 = vsel %vm1151, 1, 0
          %v1216 = vsel %vm1152, 1, 0
          %v1217 = vsel %vm1153, 1, 0
          %v1218 = vsel %vm1154, 1, 0
          %v1219 = vsel %vm1155, 1, 0
          %v1220 = vsel %vm1156, 1, 0
          %v1221 = vsel %vm1157, 1, 0
          %v1222 = vsel %vm1158, 1, 0
          %v1223 = vsel %vm1159, 1, 0
          %v1224 = vsel %vm1160, 1, 0
          %v1225 = vsel %vm1161, 1, 0
          %v1226 = vsel %vm1162, 1, 0
          %v1227 = vsel %vm1163, 1, 0
          %v1228 = vsel %vm1164, 1, 0
          %v1229 = vsel %vm1165, 1, 0
          %v1230 = vsel %vm1166, 1, 0
          %v1231 = vsel %vm1167, 1, 0
          %v1232 = vsel %vm1168, 1, 0
          %v1233 = vsel %vm1169, 1, 0
          %v1234 = vsel %vm1170, 1, 0
          %v1235 = vsel %vm1171, 1, 0
          %v1236 = vsel %vm1172, 1, 0
          %v1237 = vsel %vm1173, 1, 0
          %v1238 = vsel %vm1174, 1, 0
          %v1239 = vsel %vm1175, 1, 0
          %v1240 = vsel %vm1176, 1, 0
          %v1241 = vsel %vm1177, 1, 0
          %v1242 = vsel %vm1178, 1, 0
          %v1243 = vsel %vm1179, 1, 0
          %v1244 = vsel %vm1180, 1, 0
          %v1245 = vsel %vm1181, 1, 0
          %v1246 = vsel %vm1182, 1, 0
          %v1247 = vsel %vm1183, 1, 0
          %v1248 = vsel %vm1184, 1, 0
          %v1249 = vsel %vm1185, 1, 0
          %v1250 = vsel %vm1186, 1, 0
          %v1251 = vsel %vm1187, 1, 0
          %v1252 = vsel %vm1188, 1, 0
          %v1253 = vsel %vm1189, 1, 0
          %v1254 = vsel %vm1190, 1, 0
          %v1255 = vsel %vm1191, 1, 0
          %v1256 = vsel %vm1192, 1, 0
          %v1257 = vsel %vm1193, 1, 0
          %v1258 = vsel %vm1194, 1, 0
          %v1259 = vsel %vm1195, 1, 0
          %v1260 = vsel %vm1196, 1, 0
          %v1261 = vsel %vm1197, 1, 0
          %v1262 = vsel %vm1198, 1, 0
          %v1263 = vsel %vm1199, 1, 0
          %v1264 = vsel %vm1200, 1, 0
          %v1265 = vsel %vm1201, 1, 0
          %v1266 = vcvt.s32.f32 %v1202
          %v1267 = vcvt.s32.f32 %v1203
          %v1268 = vcvt.s32.f32 %v1204
          %v1269 = vcvt.s32.f32 %v1205
          %v1270 = vcvt.s32.f32 %v1206
          %v1271 = vcvt.s32.f32 %v1207
          %v1272 = vcvt.s32.f32 %v1208
          %v1273 = vcvt.s32.f32 %v1209
          %v1274 = vcvt.s32.f32 %v1210
          %v1275 = vcvt.s32.f32 %v1211
          %v1276 = vcvt.s32.f32 %v1212
          %v1277 = vcvt.s32.f32 %v1213
          %v1278 = vcvt.s32.f32 %v1214
          %v1279 = vcvt.s32.f32 %v1215
          %v1280 = vcvt.s32.f32 %v1216
          %v1281 = vcvt.s32.f32 %v1217
          %v1282 = vcvt.s32.f32 %v1218
          %v1283 = vcvt.s32.f32 %v1219
          %v1284 = vcvt.s32.f32 %v1220
          %v1285 = vcvt.s32.f32 %v1221
          %v1286 = vcvt.s32.f32 %v1222
          %v1287 = vcvt.s32.f32 %v1223
          %v1288 = vcvt.s32.f32 %v1224
          %v1289 = vcvt.s32.f32 %v1225
          %v1290 = vcvt.s32.f32 %v1226
          %v1291 = vcvt.s32.f32 %v1227
          %v1292 = vcvt.s32.f32 %v1228
          %v1293 = vcvt.s32.f32 %v1229
          %v1294 = vcvt.s32.f32 %v1230
          %v1295 = vcvt.s32.f32 %v1231
          %v1296 = vcvt.s32.f32 %v1232
          %v1297 = vcvt.s32.f32 %v1233
          %v1298 = vcvt.s32.f32 %v1234
          %v1299 = vcvt.s32.f32 %v1235
          %v1300 = vcvt.s32.f32 %v1236
          %v1301 = vcvt.s32.f32 %v1237
          %v1302 = vcvt.s32.f32 %v1238
          %v1303 = vcvt.s32.f32 %v1239
          %v1304 = vcvt.s32.f32 %v1240
          %v1305 = vcvt.s32.f32 %v1241
          %v1306 = vcvt.s32.f32 %v1242
          %v1307 = vcvt.s32.f32 %v1243
          %v1308 = vcvt.s32.f32 %v1244
          %v1309 = vcvt.s32.f32 %v1245
          %v1310 = vcvt.s32.f32 %v1246
          %v1311 = vcvt.s32.f32 %v1247
          %v1312 = vcvt.s32.f32 %v1248
          %v1313 = vcvt.s32.f32 %v1249
          %v1314 = vcvt.s32.f32 %v1250
          %v1315 = vcvt.s32.f32 %v1251
          %v1316 = vcvt.s32.f32 %v1252
          %v1317 = vcvt.s32.f32 %v1253
          %v1318 = vcvt.s32.f32 %v1254
          %v1319 = vcvt.s32.f32 %v1255
          %v1320 = vcvt.s32.f32 %v1256
          %v1321 = vcvt.s32.f32 %v1257
          %v1322 = vcvt.s32.f32 %v1258
          %v1323 = vcvt.s32.f32 %v1259
          %v1324 = vcvt.s32.f32 %v1260
          %v1325 = vcvt.s32.f32 %v1261
          %v1326 = vcvt.s32.f32 %v1262
          %v1327 = vcvt.s32.f32 %v1263
          %v1328 = vcvt.s32.f32 %v1264
          %v1329 = vcvt.s32.f32 %v1265
          %v1330 = vmax.f32 %v1132, 1.0
          %v1331 = vmul.f32 %v1132, 0.5
          %v1332 = vfloor.f32 %v1331
          %1333 = vmatprep.subr.mxu0 0.0
          %1334 = vmatpush1.msra.mxu0 %v767
          %1335 = vmatprep.subr.mxu0 0.0
          %1336 = vmatpush1.msra.mxu0 %v766
          %1337 = vmatprep.subr.mxu0 0.0
          %1338 = vmatpush1.msra.mxu0 %v765
          %1339 = vmatprep.subr.mxu0 0.0
          %1340 = vmatpush1.msra.mxu0 %v764
          %1341 = vmatprep.subr.mxu0 0.0
          %1342 = vmatpush1.msra.mxu0 %v763
          %1343 = vmatprep.subr.mxu0 0.0
          %1344 = vmatpush1.msra.mxu0 %v762
          %1345 = vmatprep.subr.mxu0 0.0
          %1346 = vmatpush1.msra.mxu0 %v761
          %1347 = vmatprep.subr.mxu0 0.0
          %1348 = vmatpush1.msra.mxu0 %v760
          %1349 = vmatprep.subr.mxu0 0.0
          %1350 = vmatpush1.msra.mxu0 %v759
          %1351 = vmatprep.subr.mxu0 0.0
          %1352 = vmatpush1.msra.mxu0 %v758
          %1353 = vmatprep.subr.mxu0 0.0
          %1354 = vmatpush1.msra.mxu0 %v757
          %1355 = vmatprep.subr.mxu0 0.0
          %1356 = vmatpush1.msra.mxu0 %v756
          %1357 = vmatprep.subr.mxu0 0.0
          %1358 = vmatpush1.msra.mxu0 %v755
          %1359 = vmatprep.subr.mxu0 0.0
          %1360 = vmatpush1.msra.mxu0 %v754
          %1361 = vmatprep.subr.mxu0 0.0
          %1362 = vmatpush1.msra.mxu0 %v753
          %1363 = vmatprep.subr.mxu0 0.0
          %1364 = vmatpush1.msra.mxu0 %v752
          %1365 = vmatprep.subr.mxu0 0.0
          %1366 = vmatpush2.msra.mxu0 %v783
          %1367 = vmatprep.subr.mxu0 0.0
          %1368 = vmatpush2.msra.mxu0 %v782
          %1369 = vmatprep.subr.mxu0 0.0
          %1370 = vmatpush2.msra.mxu0 %v781
          %1371 = vmatprep.subr.mxu0 0.0
          %1372 = vmatpush2.msra.mxu0 %v780
          %1373 = vmatprep.subr.mxu0 0.0
          %1374 = vmatpush2.msra.mxu0 %v779
          %1375 = vmatprep.subr.mxu0 0.0
          %1376 = vmatpush2.msra.mxu0 %v778
          %1377 = vmatprep.subr.mxu0 0.0
          %1378 = vmatpush2.msra.mxu0 %v777
          %1379 = vmatprep.subr.mxu0 0.0
          %1380 = vmatpush2.msra.mxu0 %v776
          %1381 = vmatprep.subr.mxu0 0.0
          %1382 = vmatpush2.msra.mxu0 %v775
          %1383 = vmatprep.subr.mxu0 0.0
          %1384 = vmatpush2.msra.mxu0 %v774
          %1385 = vmatprep.subr.mxu0 0.0
          %1386 = vmatpush2.msra.mxu0 %v773
          %1387 = vmatprep.subr.mxu0 0.0
          %1388 = vmatpush2.msra.mxu0 %v772
          %1389 = vmatprep.subr.mxu0 0.0
          %1390 = vmatpush2.msra.mxu0 %v771
          %1391 = vmatprep.subr.mxu0 0.0
          %1392 = vmatpush2.msra.mxu0 %v770
          %1393 = vmatprep.subr.mxu0 0.0
          %1394 = vmatpush2.msra.mxu0 %v769
          %1395 = vmatprep.subr.mxu0 0.0
          %1396 = vmatpush2.msra.mxu0 %v768
          %1397 = vmatprep.mubr.f32.mxu0 %v1267
          %1398 = vmatmul.mubr.f32.gmra.mxu0 %v1266
          %v1399 = vpop.f32.mrf.mxu0
          %v1400 = vadd.f32 %v1332, %v1399
          %v1401 = vpop.f32.mrf.mxu0
          %1402 = vmatprep.mubr.f32.mxu0 %v1269
          %1403 = vmatmul.mubr.f32.gmra.mxu0 %v1268
          %v1404 = vpop.f32.mrf.mxu0
          %v1405 = vadd.f32 %v1332, %v1404
          %v1406 = vpop.f32.mrf.mxu0
          %1407 = vmatprep.mubr.f32.mxu0 %v1271
          %1408 = vmatmul.mubr.f32.gmra.mxu0 %v1270
          %v1409 = vpop.f32.mrf.mxu0
          %v1410 = vadd.f32 %v1332, %v1409
          %v1411 = vpop.f32.mrf.mxu0
          %1412 = vmatprep.mubr.f32.mxu0 %v1273
          %1413 = vmatmul.mubr.f32.gmra.mxu0 %v1272
          %v1414 = vpop.f32.mrf.mxu0
          %v1415 = vadd.f32 %v1332, %v1414
          %v1416 = vpop.f32.mrf.mxu0
          %1417 = vmatprep.mubr.f32.mxu0 %v1275
          %1418 = vmatmul.mubr.f32.gmra.mxu0 %v1274
          %v1419 = vpop.f32.mrf.mxu0
          %v1420 = vadd.f32 %v1332, %v1419
          %v1421 = vpop.f32.mrf.mxu0
          %1422 = vmatprep.mubr.f32.mxu0 %v1277
          %1423 = vmatmul.mubr.f32.gmra.mxu0 %v1276
          %v1424 = vpop.f32.mrf.mxu0
          %v1425 = vadd.f32 %v1332, %v1424
          %v1426 = vpop.f32.mrf.mxu0
          %1427 = vmatprep.mubr.f32.mxu0 %v1279
          %1428 = vmatmul.mubr.f32.gmra.mxu0 %v1278
          %v1429 = vpop.f32.mrf.mxu0
          %v1430 = vadd.f32 %v1332, %v1429
          %v1431 = vpop.f32.mrf.mxu0
          %1432 = vmatprep.mubr.f32.mxu0 %v1281
          %1433 = vmatmul.mubr.f32.gmra.mxu0 %v1280
          %v1434 = vpop.f32.mrf.mxu0
          %v1435 = vadd.f32 %v1332, %v1434
          %v1436 = vpop.f32.mrf.mxu0
          %1437 = vmatprep.mubr.f32.mxu0 %v1283
          %1438 = vmatmul.mubr.f32.gmra.mxu0 %v1282
          %v1439 = vpop.f32.mrf.mxu0
          %v1440 = vadd.f32 %v1332, %v1439
          %v1441 = vpop.f32.mrf.mxu0
          %1442 = vmatprep.mubr.f32.mxu0 %v1285
          %1443 = vmatmul.mubr.f32.gmra.mxu0 %v1284
          %v1444 = vpop.f32.mrf.mxu0
          %v1445 = vadd.f32 %v1332, %v1444
          %v1446 = vpop.f32.mrf.mxu0
          %1447 = vmatprep.mubr.f32.mxu0 %v1287
          %1448 = vmatmul.mubr.f32.gmra.mxu0 %v1286
          %v1449 = vpop.f32.mrf.mxu0
          %v1450 = vadd.f32 %v1332, %v1449
          %v1451 = vpop.f32.mrf.mxu0
          %1452 = vmatprep.mubr.f32.mxu0 %v1289
          %1453 = vmatmul.mubr.f32.gmra.mxu0 %v1288
          %v1454 = vpop.f32.mrf.mxu0
          %v1455 = vadd.f32 %v1332, %v1454
          %v1456 = vpop.f32.mrf.mxu0
          %1457 = vmatprep.mubr.f32.mxu0 %v1291
          %1458 = vmatmul.mubr.f32.gmra.mxu0 %v1290
          %v1459 = vpop.f32.mrf.mxu0
          %v1460 = vadd.f32 %v1332, %v1459
          %v1461 = vpop.f32.mrf.mxu0
          %1462 = vmatprep.mubr.f32.mxu0 %v1293
          %1463 = vmatmul.mubr.f32.gmra.mxu0 %v1292
          %v1464 = vpop.f32.mrf.mxu0
          %v1465 = vadd.f32 %v1332, %v1464
          %v1466 = vpop.f32.mrf.mxu0
          %1467 = vmatprep.mubr.f32.mxu0 %v1295
          %1468 = vmatmul.mubr.f32.gmra.mxu0 %v1294
          %v1469 = vpop.f32.mrf.mxu0
          %v1470 = vadd.f32 %v1332, %v1469
          %v1471 = vpop.f32.mrf.mxu0
          %1472 = vmatprep.mubr.f32.mxu0 %v1297
          %1473 = vmatmul.mubr.f32.gmra.mxu0 %v1296
          %v1474 = vpop.f32.mrf.mxu0
          %v1475 = vadd.f32 %v1332, %v1474
          %v1476 = vpop.f32.mrf.mxu0
          %1477 = vmatprep.mubr.f32.mxu0 %v1299
          %1478 = vmatmul.mubr.f32.gmra.mxu0 %v1298
          %v1479 = vpop.f32.mrf.mxu0
          %v1480 = vadd.f32 %v1332, %v1479
          %v1481 = vpop.f32.mrf.mxu0
          %1482 = vmatprep.mubr.f32.mxu0 %v1301
          %1483 = vmatmul.mubr.f32.gmra.mxu0 %v1300
          %v1484 = vpop.f32.mrf.mxu0
          %v1485 = vadd.f32 %v1332, %v1484
          %v1486 = vpop.f32.mrf.mxu0
          %1487 = vmatprep.mubr.f32.mxu0 %v1303
          %1488 = vmatmul.mubr.f32.gmra.mxu0 %v1302
          %v1489 = vpop.f32.mrf.mxu0
          %v1490 = vadd.f32 %v1332, %v1489
          %v1491 = vpop.f32.mrf.mxu0
          %1492 = vmatprep.mubr.f32.mxu0 %v1305
          %1493 = vmatmul.mubr.f32.gmra.mxu0 %v1304
          %v1494 = vpop.f32.mrf.mxu0
          %v1495 = vadd.f32 %v1332, %v1494
          %v1496 = vpop.f32.mrf.mxu0
          %1497 = vmatprep.mubr.f32.mxu0 %v1307
          %1498 = vmatmul.mubr.f32.gmra.mxu0 %v1306
          %v1499 = vpop.f32.mrf.mxu0
          %v1500 = vadd.f32 %v1332, %v1499
          %v1501 = vpop.f32.mrf.mxu0
          %1502 = vmatprep.mubr.f32.mxu0 %v1309
          %1503 = vmatmul.mubr.f32.gmra.mxu0 %v1308
          %v1504 = vpop.f32.mrf.mxu0
          %v1505 = vadd.f32 %v1332, %v1504
          %v1506 = vpop.f32.mrf.mxu0
          %1507 = vmatprep.mubr.f32.mxu0 %v1311
          %1508 = vmatmul.mubr.f32.gmra.mxu0 %v1310
          %v1509 = vpop.f32.mrf.mxu0
          %v1510 = vadd.f32 %v1332, %v1509
          %v1511 = vpop.f32.mrf.mxu0
          %1512 = vmatprep.mubr.f32.mxu0 %v1313
          %1513 = vmatmul.mubr.f32.gmra.mxu0 %v1312
          %v1514 = vpop.f32.mrf.mxu0
          %v1515 = vadd.f32 %v1332, %v1514
          %v1516 = vpop.f32.mrf.mxu0
          %1517 = vmatprep.mubr.f32.mxu0 %v1315
          %1518 = vmatmul.mubr.f32.gmra.mxu0 %v1314
          %v1519 = vpop.f32.mrf.mxu0
          %v1520 = vadd.f32 %v1332, %v1519
          %v1521 = vpop.f32.mrf.mxu0
          %1522 = vmatprep.mubr.f32.mxu0 %v1317
          %1523 = vmatmul.mubr.f32.gmra.mxu0 %v1316
          %v1524 = vpop.f32.mrf.mxu0
          %v1525 = vadd.f32 %v1332, %v1524
          %v1526 = vpop.f32.mrf.mxu0
          %1527 = vmatprep.mubr.f32.mxu0 %v1319
          %1528 = vmatmul.mubr.f32.gmra.mxu0 %v1318
          %v1529 = vpop.f32.mrf.mxu0
          %v1530 = vadd.f32 %v1332, %v1529
          %v1531 = vpop.f32.mrf.mxu0
          %1532 = vmatprep.mubr.f32.mxu0 %v1321
          %1533 = vmatmul.mubr.f32.gmra.mxu0 %v1320
          %v1534 = vpop.f32.mrf.mxu0
          %v1535 = vadd.f32 %v1332, %v1534
          %v1536 = vpop.f32.mrf.mxu0
          %1537 = vmatprep.mubr.f32.mxu0 %v1323
          %1538 = vmatmul.mubr.f32.gmra.mxu0 %v1322
          %v1539 = vpop.f32.mrf.mxu0
          %v1540 = vadd.f32 %v1332, %v1539
          %v1541 = vpop.f32.mrf.mxu0
          %1542 = vmatprep.mubr.f32.mxu0 %v1325
          %1543 = vmatmul.mubr.f32.gmra.mxu0 %v1324
          %v1544 = vpop.f32.mrf.mxu0
          %v1545 = vadd.f32 %v1332, %v1544
          %v1546 = vpop.f32.mrf.mxu0
          %1547 = vmatprep.mubr.f32.mxu0 %v1327
          %1548 = vmatmul.mubr.f32.gmra.mxu0 %v1326
          %v1549 = vpop.f32.mrf.mxu0
          %v1550 = vadd.f32 %v1332, %v1549
          %v1551 = vpop.f32.mrf.mxu0
          %1552 = vmatprep.mubr.f32.mxu0 %v1329
          %1553 = vmatmul.mubr.f32.gmra.mxu0 %v1328
          %v1554 = vpop.f32.mrf.mxu0
          %v1555 = vadd.f32 %v1332, %v1554
          %v1556 = vpop.f32.mrf.mxu0
          %1557 = vdwg.mxu0
          %v1558 = vrcp.pop %v1330
          %v1559 = vmul.f32 %v1400, %v1558
          %v1560 = vmul.f32 %v1405, %v1558
          %v1561 = vmul.f32 %v1410, %v1558
          %v1562 = vmul.f32 %v1415, %v1558
          %v1563 = vmul.f32 %v1420, %v1558
          %v1564 = vmul.f32 %v1425, %v1558
          %v1565 = vmul.f32 %v1430, %v1558
          %v1566 = vmul.f32 %v1435, %v1558
          %v1567 = vmul.f32 %v1440, %v1558
          %v1568 = vmul.f32 %v1445, %v1558
          %v1569 = vmul.f32 %v1450, %v1558
          %v1570 = vmul.f32 %v1455, %v1558
          %v1571 = vmul.f32 %v1460, %v1558
          %v1572 = vmul.f32 %v1465, %v1558
          %v1573 = vmul.f32 %v1470, %v1558
          %v1574 = vmul.f32 %v1475, %v1558
          %v1575 = vmul.f32 %v1480, %v1558
          %v1576 = vmul.f32 %v1485, %v1558
          %v1577 = vmul.f32 %v1490, %v1558
          %v1578 = vmul.f32 %v1495, %v1558
          %v1579 = vmul.f32 %v1500, %v1558
          %v1580 = vmul.f32 %v1505, %v1558
          %v1581 = vmul.f32 %v1510, %v1558
          %v1582 = vmul.f32 %v1515, %v1558
          %v1583 = vmul.f32 %v1520, %v1558
          %v1584 = vmul.f32 %v1525, %v1558
          %v1585 = vmul.f32 %v1530, %v1558
          %v1586 = vmul.f32 %v1535, %v1558
          %v1587 = vmul.f32 %v1540, %v1558
          %v1588 = vmul.f32 %v1545, %v1558
          %v1589 = vmul.f32 %v1550, %v1558
          %v1590 = vmul.f32 %v1555, %v1558
          %v1591 = vfloor.f32 %v1559
          %v1592 = vfloor.f32 %v1560
          %v1593 = vfloor.f32 %v1561
          %v1594 = vfloor.f32 %v1562
          %v1595 = vfloor.f32 %v1563
          %v1596 = vfloor.f32 %v1564
          %v1597 = vfloor.f32 %v1565
          %v1598 = vfloor.f32 %v1566
          %v1599 = vfloor.f32 %v1567
          %v1600 = vfloor.f32 %v1568
          %v1601 = vfloor.f32 %v1569
          %v1602 = vfloor.f32 %v1570
          %v1603 = vfloor.f32 %v1571
          %v1604 = vfloor.f32 %v1572
          %v1605 = vfloor.f32 %v1573
          %v1606 = vfloor.f32 %v1574
          %v1607 = vfloor.f32 %v1575
          %v1608 = vfloor.f32 %v1576
          %v1609 = vfloor.f32 %v1577
          %v1610 = vfloor.f32 %v1578
          %v1611 = vfloor.f32 %v1579
          %v1612 = vfloor.f32 %v1580
          %v1613 = vfloor.f32 %v1581
          %v1614 = vfloor.f32 %v1582
          %v1615 = vfloor.f32 %v1583
          %v1616 = vfloor.f32 %v1584
          %v1617 = vfloor.f32 %v1585
          %v1618 = vfloor.f32 %v1586
          %v1619 = vfloor.f32 %v1587
          %v1620 = vfloor.f32 %v1588
          %v1621 = vfloor.f32 %v1589
          %v1622 = vfloor.f32 %v1590
          %v1623 = vmul.f32 %v1591, %v1330
          %v1624 = vmul.f32 %v1592, %v1330
          %v1625 = vmul.f32 %v1593, %v1330
          %v1626 = vmul.f32 %v1594, %v1330
          %v1627 = vmul.f32 %v1595, %v1330
          %v1628 = vmul.f32 %v1596, %v1330
          %v1629 = vmul.f32 %v1597, %v1330
          %v1630 = vmul.f32 %v1598, %v1330
          %v1631 = vmul.f32 %v1599, %v1330
          %v1632 = vmul.f32 %v1600, %v1330
          %v1633 = vmul.f32 %v1601, %v1330
          %v1634 = vmul.f32 %v1602, %v1330
          %v1635 = vmul.f32 %v1603, %v1330
          %v1636 = vmul.f32 %v1604, %v1330
          %v1637 = vmul.f32 %v1605, %v1330
          %v1638 = vmul.f32 %v1606, %v1330
          %v1639 = vmul.f32 %v1607, %v1330
          %v1640 = vmul.f32 %v1608, %v1330
          %v1641 = vmul.f32 %v1609, %v1330
          %v1642 = vmul.f32 %v1610, %v1330
          %v1643 = vmul.f32 %v1611, %v1330
          %v1644 = vmul.f32 %v1612, %v1330
          %v1645 = vmul.f32 %v1613, %v1330
          %v1646 = vmul.f32 %v1614, %v1330
          %v1647 = vmul.f32 %v1615, %v1330
          %v1648 = vmul.f32 %v1616, %v1330
          %v1649 = vmul.f32 %v1617, %v1330
          %v1650 = vmul.f32 %v1618, %v1330
          %v1651 = vmul.f32 %v1619, %v1330
          %v1652 = vmul.f32 %v1620, %v1330
          %v1653 = vmul.f32 %v1621, %v1330
          %v1654 = vmul.f32 %v1622, %v1330
          %v1655 = vsub.f32 %v1400, %v1623
          %v1656 = vsub.f32 %v1405, %v1624
          %v1657 = vsub.f32 %v1410, %v1625
          %v1658 = vsub.f32 %v1415, %v1626
          %v1659 = vsub.f32 %v1420, %v1627
          %v1660 = vsub.f32 %v1425, %v1628
          %v1661 = vsub.f32 %v1430, %v1629
          %v1662 = vsub.f32 %v1435, %v1630
          %v1663 = vsub.f32 %v1440, %v1631
          %v1664 = vsub.f32 %v1445, %v1632
          %v1665 = vsub.f32 %v1450, %v1633
          %v1666 = vsub.f32 %v1455, %v1634
          %v1667 = vsub.f32 %v1460, %v1635
          %v1668 = vsub.f32 %v1465, %v1636
          %v1669 = vsub.f32 %v1470, %v1637
          %v1670 = vsub.f32 %v1475, %v1638
          %v1671 = vsub.f32 %v1480, %v1639
          %v1672 = vsub.f32 %v1485, %v1640
          %v1673 = vsub.f32 %v1490, %v1641
          %v1674 = vsub.f32 %v1495, %v1642
          %v1675 = vsub.f32 %v1500, %v1643
          %v1676 = vsub.f32 %v1505, %v1644
          %v1677 = vsub.f32 %v1510, %v1645
          %v1678 = vsub.f32 %v1515, %v1646
          %v1679 = vsub.f32 %v1520, %v1647
          %v1680 = vsub.f32 %v1525, %v1648
          %v1681 = vsub.f32 %v1530, %v1649
          %v1682 = vsub.f32 %v1535, %v1650
          %v1683 = vsub.f32 %v1540, %v1651
          %v1684 = vsub.f32 %v1545, %v1652
          %v1685 = vsub.f32 %v1550, %v1653
          %v1686 = vsub.f32 %v1555, %v1654
          %vm1687 = vcmp.ge.f32.partialorder %v1655, %v1330
          %vm1688 = vcmp.ge.f32.partialorder %v1656, %v1330
          %vm1689 = vcmp.ge.f32.partialorder %v1657, %v1330
          %vm1690 = vcmp.ge.f32.partialorder %v1658, %v1330
          %vm1691 = vcmp.ge.f32.partialorder %v1659, %v1330
          %vm1692 = vcmp.ge.f32.partialorder %v1660, %v1330
          %vm1693 = vcmp.ge.f32.partialorder %v1661, %v1330
          %vm1694 = vcmp.ge.f32.partialorder %v1662, %v1330
          %vm1695 = vcmp.ge.f32.partialorder %v1663, %v1330
          %vm1696 = vcmp.ge.f32.partialorder %v1664, %v1330
          %vm1697 = vcmp.ge.f32.partialorder %v1665, %v1330
          %vm1698 = vcmp.ge.f32.partialorder %v1666, %v1330
          %vm1699 = vcmp.ge.f32.partialorder %v1667, %v1330
          %vm1700 = vcmp.ge.f32.partialorder %v1668, %v1330
          %vm1701 = vcmp.ge.f32.partialorder %v1669, %v1330
          %vm1702 = vcmp.ge.f32.partialorder %v1670, %v1330
          %vm1703 = vcmp.ge.f32.partialorder %v1671, %v1330
          %vm1704 = vcmp.ge.f32.partialorder %v1672, %v1330
          %vm1705 = vcmp.ge.f32.partialorder %v1673, %v1330
          %vm1706 = vcmp.ge.f32.partialorder %v1674, %v1330
          %vm1707 = vcmp.ge.f32.partialorder %v1675, %v1330
          %vm1708 = vcmp.ge.f32.partialorder %v1676, %v1330
          %vm1709 = vcmp.ge.f32.partialorder %v1677, %v1330
          %vm1710 = vcmp.ge.f32.partialorder %v1678, %v1330
          %vm1711 = vcmp.ge.f32.partialorder %v1679, %v1330
          %vm1712 = vcmp.ge.f32.partialorder %v1680, %v1330
          %vm1713 = vcmp.ge.f32.partialorder %v1681, %v1330
          %vm1714 = vcmp.ge.f32.partialorder %v1682, %v1330
          %vm1715 = vcmp.ge.f32.partialorder %v1683, %v1330
          %vm1716 = vcmp.ge.f32.partialorder %v1684, %v1330
          %vm1717 = vcmp.ge.f32.partialorder %v1685, %v1330
          %vm1718 = vcmp.ge.f32.partialorder %v1686, %v1330
          %v1719 = vsel %vm1687, 1, 0
          %v1720 = vsel %vm1688, 1, 0
          %v1721 = vsel %vm1689, 1, 0
          %v1722 = vsel %vm1690, 1, 0
          %v1723 = vsel %vm1691, 1, 0
          %v1724 = vsel %vm1692, 1, 0
          %v1725 = vsel %vm1693, 1, 0
          %v1726 = vsel %vm1694, 1, 0
          %v1727 = vsel %vm1695, 1, 0
          %v1728 = vsel %vm1696, 1, 0
          %v1729 = vsel %vm1697, 1, 0
          %v1730 = vsel %vm1698, 1, 0
          %v1731 = vsel %vm1699, 1, 0
          %v1732 = vsel %vm1700, 1, 0
          %v1733 = vsel %vm1701, 1, 0
          %v1734 = vsel %vm1702, 1, 0
          %v1735 = vsel %vm1703, 1, 0
          %v1736 = vsel %vm1704, 1, 0
          %v1737 = vsel %vm1705, 1, 0
          %v1738 = vsel %vm1706, 1, 0
          %v1739 = vsel %vm1707, 1, 0
          %v1740 = vsel %vm1708, 1, 0
          %v1741 = vsel %vm1709, 1, 0
          %v1742 = vsel %vm1710, 1, 0
          %v1743 = vsel %vm1711, 1, 0
          %v1744 = vsel %vm1712, 1, 0
          %v1745 = vsel %vm1713, 1, 0
          %v1746 = vsel %vm1714, 1, 0
          %v1747 = vsel %vm1715, 1, 0
          %v1748 = vsel %vm1716, 1, 0
          %v1749 = vsel %vm1717, 1, 0
          %v1750 = vsel %vm1718, 1, 0
          %v1751 = vcvt.s32.f32 %v1719
          %v1752 = vcvt.s32.f32 %v1720
          %v1753 = vcvt.s32.f32 %v1721
          %v1754 = vcvt.s32.f32 %v1722
          %v1755 = vcvt.s32.f32 %v1723
          %v1756 = vcvt.s32.f32 %v1724
          %v1757 = vcvt.s32.f32 %v1725
          %v1758 = vcvt.s32.f32 %v1726
          %v1759 = vcvt.s32.f32 %v1727
          %v1760 = vcvt.s32.f32 %v1728
          %v1761 = vcvt.s32.f32 %v1729
          %v1762 = vcvt.s32.f32 %v1730
          %v1763 = vcvt.s32.f32 %v1731
          %v1764 = vcvt.s32.f32 %v1732
          %v1765 = vcvt.s32.f32 %v1733
          %v1766 = vcvt.s32.f32 %v1734
          %v1767 = vcvt.s32.f32 %v1735
          %v1768 = vcvt.s32.f32 %v1736
          %v1769 = vcvt.s32.f32 %v1737
          %v1770 = vcvt.s32.f32 %v1738
          %v1771 = vcvt.s32.f32 %v1739
          %v1772 = vcvt.s32.f32 %v1740
          %v1773 = vcvt.s32.f32 %v1741
          %v1774 = vcvt.s32.f32 %v1742
          %v1775 = vcvt.s32.f32 %v1743
          %v1776 = vcvt.s32.f32 %v1744
          %v1777 = vcvt.s32.f32 %v1745
          %v1778 = vcvt.s32.f32 %v1746
          %v1779 = vcvt.s32.f32 %v1747
          %v1780 = vcvt.s32.f32 %v1748
          %v1781 = vcvt.s32.f32 %v1749
          %v1782 = vcvt.s32.f32 %v1750
          %v1783 = vadd.f32 %v1591, %v1751
          %v1784 = vadd.f32 %v1592, %v1752
          %v1785 = vadd.f32 %v1593, %v1753
          %v1786 = vadd.f32 %v1594, %v1754
          %v1787 = vadd.f32 %v1595, %v1755
          %v1788 = vadd.f32 %v1596, %v1756
          %v1789 = vadd.f32 %v1597, %v1757
          %v1790 = vadd.f32 %v1598, %v1758
          %v1791 = vadd.f32 %v1599, %v1759
          %v1792 = vadd.f32 %v1600, %v1760
          %v1793 = vadd.f32 %v1601, %v1761
          %v1794 = vadd.f32 %v1602, %v1762
          %v1795 = vadd.f32 %v1603, %v1763
          %v1796 = vadd.f32 %v1604, %v1764
          %v1797 = vadd.f32 %v1605, %v1765
          %v1798 = vadd.f32 %v1606, %v1766
          %v1799 = vadd.f32 %v1607, %v1767
          %v1800 = vadd.f32 %v1608, %v1768
          %v1801 = vadd.f32 %v1609, %v1769
          %v1802 = vadd.f32 %v1610, %v1770
          %v1803 = vadd.f32 %v1611, %v1771
          %v1804 = vadd.f32 %v1612, %v1772
          %v1805 = vadd.f32 %v1613, %v1773
          %v1806 = vadd.f32 %v1614, %v1774
          %v1807 = vadd.f32 %v1615, %v1775
          %v1808 = vadd.f32 %v1616, %v1776
          %v1809 = vadd.f32 %v1617, %v1777
          %v1810 = vadd.f32 %v1618, %v1778
          %v1811 = vadd.f32 %v1619, %v1779
          %v1812 = vadd.f32 %v1620, %v1780
          %v1813 = vadd.f32 %v1621, %v1781
          %v1814 = vadd.f32 %v1622, %v1782
          %vm1815 = vcmp.lt.f32.partialorder %v1655, 0.0
          %vm1816 = vcmp.lt.f32.partialorder %v1656, 0.0
          %vm1817 = vcmp.lt.f32.partialorder %v1657, 0.0
          %vm1818 = vcmp.lt.f32.partialorder %v1658, 0.0
          %vm1819 = vcmp.lt.f32.partialorder %v1659, 0.0
          %vm1820 = vcmp.lt.f32.partialorder %v1660, 0.0
          %vm1821 = vcmp.lt.f32.partialorder %v1661, 0.0
          %vm1822 = vcmp.lt.f32.partialorder %v1662, 0.0
          %vm1823 = vcmp.lt.f32.partialorder %v1663, 0.0
          %vm1824 = vcmp.lt.f32.partialorder %v1664, 0.0
          %vm1825 = vcmp.lt.f32.partialorder %v1665, 0.0
          %vm1826 = vcmp.lt.f32.partialorder %v1666, 0.0
          %vm1827 = vcmp.lt.f32.partialorder %v1667, 0.0
          %vm1828 = vcmp.lt.f32.partialorder %v1668, 0.0
          %vm1829 = vcmp.lt.f32.partialorder %v1669, 0.0
          %vm1830 = vcmp.lt.f32.partialorder %v1670, 0.0
          %vm1831 = vcmp.lt.f32.partialorder %v1671, 0.0
          %vm1832 = vcmp.lt.f32.partialorder %v1672, 0.0
          %vm1833 = vcmp.lt.f32.partialorder %v1673, 0.0
          %vm1834 = vcmp.lt.f32.partialorder %v1674, 0.0
          %vm1835 = vcmp.lt.f32.partialorder %v1675, 0.0
          %vm1836 = vcmp.lt.f32.partialorder %v1676, 0.0
          %vm1837 = vcmp.lt.f32.partialorder %v1677, 0.0
          %vm1838 = vcmp.lt.f32.partialorder %v1678, 0.0
          %vm1839 = vcmp.lt.f32.partialorder %v1679, 0.0
          %vm1840 = vcmp.lt.f32.partialorder %v1680, 0.0
          %vm1841 = vcmp.lt.f32.partialorder %v1681, 0.0
          %vm1842 = vcmp.lt.f32.partialorder %v1682, 0.0
          %vm1843 = vcmp.lt.f32.partialorder %v1683, 0.0
          %vm1844 = vcmp.lt.f32.partialorder %v1684, 0.0
          %vm1845 = vcmp.lt.f32.partialorder %v1685, 0.0
          %vm1846 = vcmp.lt.f32.partialorder %v1686, 0.0
          %v1847 = vsel %vm1815, 1, 0
          %v1848 = vsel %vm1816, 1, 0
          %v1849 = vsel %vm1817, 1, 0
          %v1850 = vsel %vm1818, 1, 0
          %v1851 = vsel %vm1819, 1, 0
          %v1852 = vsel %vm1820, 1, 0
          %v1853 = vsel %vm1821, 1, 0
          %v1854 = vsel %vm1822, 1, 0
          %v1855 = vsel %vm1823, 1, 0
          %v1856 = vsel %vm1824, 1, 0
          %v1857 = vsel %vm1825, 1, 0
          %v1858 = vsel %vm1826, 1, 0
          %v1859 = vsel %vm1827, 1, 0
          %v1860 = vsel %vm1828, 1, 0
          %v1861 = vsel %vm1829, 1, 0
          %v1862 = vsel %vm1830, 1, 0
          %v1863 = vsel %vm1831, 1, 0
          %v1864 = vsel %vm1832, 1, 0
          %v1865 = vsel %vm1833, 1, 0
          %v1866 = vsel %vm1834, 1, 0
          %v1867 = vsel %vm1835, 1, 0
          %v1868 = vsel %vm1836, 1, 0
          %v1869 = vsel %vm1837, 1, 0
          %v1870 = vsel %vm1838, 1, 0
          %v1871 = vsel %vm1839, 1, 0
          %v1872 = vsel %vm1840, 1, 0
          %v1873 = vsel %vm1841, 1, 0
          %v1874 = vsel %vm1842, 1, 0
          %v1875 = vsel %vm1843, 1, 0
          %v1876 = vsel %vm1844, 1, 0
          %v1877 = vsel %vm1845, 1, 0
          %v1878 = vsel %vm1846, 1, 0
          %v1879 = vcvt.s32.f32 %v1847
          %v1880 = vcvt.s32.f32 %v1848
          %v1881 = vcvt.s32.f32 %v1849
          %v1882 = vcvt.s32.f32 %v1850
          %v1883 = vcvt.s32.f32 %v1851
          %v1884 = vcvt.s32.f32 %v1852
          %v1885 = vcvt.s32.f32 %v1853
          %v1886 = vcvt.s32.f32 %v1854
          %v1887 = vcvt.s32.f32 %v1855
          %v1888 = vcvt.s32.f32 %v1856
          %v1889 = vcvt.s32.f32 %v1857
          %v1890 = vcvt.s32.f32 %v1858
          %v1891 = vcvt.s32.f32 %v1859
          %v1892 = vcvt.s32.f32 %v1860
          %v1893 = vcvt.s32.f32 %v1861
          %v1894 = vcvt.s32.f32 %v1862
          %v1895 = vcvt.s32.f32 %v1863
          %v1896 = vcvt.s32.f32 %v1864
          %v1897 = vcvt.s32.f32 %v1865
          %v1898 = vcvt.s32.f32 %v1866
          %v1899 = vcvt.s32.f32 %v1867
          %v1900 = vcvt.s32.f32 %v1868
          %v1901 = vcvt.s32.f32 %v1869
          %v1902 = vcvt.s32.f32 %v1870
          %v1903 = vcvt.s32.f32 %v1871
          %v1904 = vcvt.s32.f32 %v1872
          %v1905 = vcvt.s32.f32 %v1873
          %v1906 = vcvt.s32.f32 %v1874
          %v1907 = vcvt.s32.f32 %v1875
          %v1908 = vcvt.s32.f32 %v1876
          %v1909 = vcvt.s32.f32 %v1877
          %v1910 = vcvt.s32.f32 %v1878
          %v1911 = vsub.f32 %v1783, %v1879
          %v1912 = vsub.f32 %v1784, %v1880
          %v1913 = vsub.f32 %v1785, %v1881
          %v1914 = vsub.f32 %v1786, %v1882
          %v1915 = vsub.f32 %v1787, %v1883
          %v1916 = vsub.f32 %v1788, %v1884
          %v1917 = vsub.f32 %v1789, %v1885
          %v1918 = vsub.f32 %v1790, %v1886
          %v1919 = vsub.f32 %v1791, %v1887
          %v1920 = vsub.f32 %v1792, %v1888
          %v1921 = vsub.f32 %v1793, %v1889
          %v1922 = vsub.f32 %v1794, %v1890
          %v1923 = vsub.f32 %v1795, %v1891
          %v1924 = vsub.f32 %v1796, %v1892
          %v1925 = vsub.f32 %v1797, %v1893
          %v1926 = vsub.f32 %v1798, %v1894
          %v1927 = vsub.f32 %v1799, %v1895
          %v1928 = vsub.f32 %v1800, %v1896
          %v1929 = vsub.f32 %v1801, %v1897
          %v1930 = vsub.f32 %v1802, %v1898
          %v1931 = vsub.f32 %v1803, %v1899
          %v1932 = vsub.f32 %v1804, %v1900
          %v1933 = vsub.f32 %v1805, %v1901
          %v1934 = vsub.f32 %v1806, %v1902
          %v1935 = vsub.f32 %v1807, %v1903
          %v1936 = vsub.f32 %v1808, %v1904
          %v1937 = vsub.f32 %v1809, %v1905
          %v1938 = vsub.f32 %v1810, %v1906
          %v1939 = vsub.f32 %v1811, %v1907
          %v1940 = vsub.f32 %v1812, %v1908
          %v1941 = vsub.f32 %v1813, %v1909
          %v1942 = vsub.f32 %v1814, %v1910
          %v1943 = vmax.f32 %v1911, 0.0
          %v1944 = vmax.f32 %v1912, 0.0
          %v1945 = vmax.f32 %v1913, 0.0
          %v1946 = vmax.f32 %v1914, 0.0
          %v1947 = vmax.f32 %v1915, 0.0
          %v1948 = vmax.f32 %v1916, 0.0
          %v1949 = vmax.f32 %v1917, 0.0
          %v1950 = vmax.f32 %v1918, 0.0
          %v1951 = vmax.f32 %v1919, 0.0
          %v1952 = vmax.f32 %v1920, 0.0
          %v1953 = vmax.f32 %v1921, 0.0
          %v1954 = vmax.f32 %v1922, 0.0
          %v1955 = vmax.f32 %v1923, 0.0
          %v1956 = vmax.f32 %v1924, 0.0
          %v1957 = vmax.f32 %v1925, 0.0
          %v1958 = vmax.f32 %v1926, 0.0
          %v1959 = vmax.f32 %v1927, 0.0
          %v1960 = vmax.f32 %v1928, 0.0
          %v1961 = vmax.f32 %v1929, 0.0
          %v1962 = vmax.f32 %v1930, 0.0
          %v1963 = vmax.f32 %v1931, 0.0
          %v1964 = vmax.f32 %v1932, 0.0
          %v1965 = vmax.f32 %v1933, 0.0
          %v1966 = vmax.f32 %v1934, 0.0
          %v1967 = vmax.f32 %v1935, 0.0
          %v1968 = vmax.f32 %v1936, 0.0
          %v1969 = vmax.f32 %v1937, 0.0
          %v1970 = vmax.f32 %v1938, 0.0
          %v1971 = vmax.f32 %v1939, 0.0
          %v1972 = vmax.f32 %v1940, 0.0
          %v1973 = vmax.f32 %v1941, 0.0
          %v1974 = vmax.f32 %v1942, 0.0
          %v1975 = vmin.f32 %v1943, 255.0
          %v1976 = vmin.f32 %v1944, 255.0
          %v1977 = vmin.f32 %v1945, 255.0
          %v1978 = vmin.f32 %v1946, 255.0
          %v1979 = vmin.f32 %v1947, 255.0
          %v1980 = vmin.f32 %v1948, 255.0
          %v1981 = vmin.f32 %v1949, 255.0
          %v1982 = vmin.f32 %v1950, 255.0
          %v1983 = vmin.f32 %v1951, 255.0
          %v1984 = vmin.f32 %v1952, 255.0
          %v1985 = vmin.f32 %v1953, 255.0
          %v1986 = vmin.f32 %v1954, 255.0
          %v1987 = vmin.f32 %v1955, 255.0
          %v1988 = vmin.f32 %v1956, 255.0
          %v1989 = vmin.f32 %v1957, 255.0
          %v1990 = vmin.f32 %v1958, 255.0
          %v1991 = vmin.f32 %v1959, 255.0
          %v1992 = vmin.f32 %v1960, 255.0
          %v1993 = vmin.f32 %v1961, 255.0
          %v1994 = vmin.f32 %v1962, 255.0
          %v1995 = vmin.f32 %v1963, 255.0
          %v1996 = vmin.f32 %v1964, 255.0
          %v1997 = vmin.f32 %v1965, 255.0
          %v1998 = vmin.f32 %v1966, 255.0
          %v1999 = vmin.f32 %v1967, 255.0
          %v2000 = vmin.f32 %v1968, 255.0
          %v2001 = vmin.f32 %v1969, 255.0
          %v2002 = vmin.f32 %v1970, 255.0
          %v2003 = vmin.f32 %v1971, 255.0
          %v2004 = vmin.f32 %v1972, 255.0
          %v2005 = vmin.f32 %v1973, 255.0
          %v2006 = vmin.f32 %v1974, 255.0
          %vm2007 = vcmp.ge.f32.partialorder %v1132, 1.0
          %v2008 = vsel %vm2007, 1, 0
          %vm2009 = vcmp.eq.s32.totalorder %v2008, 1
          %v2010 = vsel %vm2009, %v1975, %v224
          %v2011 = vsel %vm2009, %v1976, %v225
          %v2012 = vsel %vm2009, %v1977, %v226
          %v2013 = vsel %vm2009, %v1978, %v227
          %v2014 = vsel %vm2009, %v1979, %v228
          %v2015 = vsel %vm2009, %v1980, %v229
          %v2016 = vsel %vm2009, %v1981, %v230
          %v2017 = vsel %vm2009, %v1982, %v231
          %v2018 = vsel %vm2009, %v1983, %v232
          %v2019 = vsel %vm2009, %v1984, %v233
          %v2020 = vsel %vm2009, %v1985, %v234
          %v2021 = vsel %vm2009, %v1986, %v235
          %v2022 = vsel %vm2009, %v1987, %v236
          %v2023 = vsel %vm2009, %v1988, %v237
          %v2024 = vsel %vm2009, %v1989, %v238
          %v2025 = vsel %vm2009, %v1990, %v239
          %v2026 = vsel %vm2009, %v1991, %v240
          %v2027 = vsel %vm2009, %v1992, %v241
          %v2028 = vsel %vm2009, %v1993, %v242
          %v2029 = vsel %vm2009, %v1994, %v243
          %v2030 = vsel %vm2009, %v1995, %v244
          %v2031 = vsel %vm2009, %v1996, %v245
          %v2032 = vsel %vm2009, %v1997, %v246
          %v2033 = vsel %vm2009, %v1998, %v247
          %v2034 = vsel %vm2009, %v1999, %v248
          %v2035 = vsel %vm2009, %v2000, %v249
          %v2036 = vsel %vm2009, %v2001, %v250
          %v2037 = vsel %vm2009, %v2002, %v251
          %v2038 = vsel %vm2009, %v2003, %v252
          %v2039 = vsel %vm2009, %v2004, %v253
          %v2040 = vsel %vm2009, %v2005, %v254
          %v2041 = vsel %vm2009, %v2006, %v255
          %2042 = vst.msk [vmem:[%s150] sm:$0xff] %vm716, %v2010
          %2043 = vst.msk [vmem:[%s150 + $0x8] sm:$0xff] %vm716, %v2011
          %2044 = vst.msk [vmem:[%s150 + $0x10] sm:$0xff] %vm716, %v2012
          %2045 = vst.msk [vmem:[%s150 + $0x18] sm:$0xff] %vm716, %v2013
          %2046 = vst.msk [vmem:[%s150 + $0x20] sm:$0xff] %vm716, %v2014
          %2047 = vst.msk [vmem:[%s150 + $0x28] sm:$0xff] %vm716, %v2015
          %2048 = vst.msk [vmem:[%s150 + $0x30] sm:$0xff] %vm716, %v2016
          %2049 = vst.msk [vmem:[%s150 + $0x38] sm:$0xff] %vm716, %v2017
          %2050 = vst.msk [vmem:[%s150 + $0x40] sm:$0xff] %vm716, %v2018
          %2051 = vst.msk [vmem:[%s150 + $0x48] sm:$0xff] %vm716, %v2019
          %2052 = vst.msk [vmem:[%s150 + $0x50] sm:$0xff] %vm716, %v2020
          %2053 = vst.msk [vmem:[%s150 + $0x58] sm:$0xff] %vm716, %v2021
          %2054 = vst.msk [vmem:[%s150 + $0x60] sm:$0xff] %vm716, %v2022
          %2055 = vst.msk [vmem:[%s150 + $0x68] sm:$0xff] %vm716, %v2023
          %2056 = vst.msk [vmem:[%s150 + $0x70] sm:$0xff] %vm716, %v2024
          %2057 = vst.msk [vmem:[%s150 + $0x78] sm:$0xff] %vm716, %v2025
          %2058 = vst.msk [vmem:[%s150 + $0x80] sm:$0xff] %vm716, %v2026
          %2059 = vst.msk [vmem:[%s150 + $0x88] sm:$0xff] %vm716, %v2027
          %2060 = vst.msk [vmem:[%s150 + $0x90] sm:$0xff] %vm716, %v2028
          %2061 = vst.msk [vmem:[%s150 + $0x98] sm:$0xff] %vm716, %v2029
          %2062 = vst.msk [vmem:[%s150 + $0xa0] sm:$0xff] %vm716, %v2030
          %2063 = vst.msk [vmem:[%s150 + $0xa8] sm:$0xff] %vm716, %v2031
          %2064 = vst.msk [vmem:[%s150 + $0xb0] sm:$0xff] %vm716, %v2032
          %2065 = vst.msk [vmem:[%s150 + $0xb8] sm:$0xff] %vm716, %v2033
          %2066 = vst.msk [vmem:[%s150 + $0xc0] sm:$0xff] %vm716, %v2034
          %2067 = vst.msk [vmem:[%s150 + $0xc8] sm:$0xff] %vm716, %v2035
          %2068 = vst.msk [vmem:[%s150 + $0xd0] sm:$0xff] %vm716, %v2036
          %2069 = vst.msk [vmem:[%s150 + $0xd8] sm:$0xff] %vm716, %v2037
          %2070 = vst.msk [vmem:[%s150 + $0xe0] sm:$0xff] %vm716, %v2038
          %2071 = vst.msk [vmem:[%s150 + $0xe8] sm:$0xff] %vm716, %v2039
          %2072 = vst.msk [vmem:[%s150 + $0xf0] sm:$0xff] %vm716, %v2040
          %2073 = vst.msk [vmem:[%s150 + $0xf8] sm:$0xff] %vm716, %v2041
        $region36: #{tpu_custom_call.1} parent=23 // pred_fallthru
          _
        %p2074 = scmp.lt.s32.totalorder %s19, 2
        %s2075 = scalar_select %p2074, %s19, 2
        %s2076 = smul.addr %s2075, 32
        %s2077 = smul.addr %s2076, 8
        %s2078 = scalar_lea.vmem %s1, %s2077
        // Predicated region
        $region37: #{tpu_custom_call.1} parent=23 // pred_check
          %p2079 = pneg %p73
        $region38: #{tpu_custom_call.1} parent=23 // pred_check_branch
          %2081 = sbr.rel (%p2079) target = $region40
        $region39: #{tpu_custom_call.1} parent=23 // pred_region
          _
        $region40: #{tpu_custom_call.1} parent=23 // pred_fallthru
          _
      $region24: #{tpu_custom_call.1} parent=5 // pred_fallthru
        _
      %p2082 = scmp.le.s32.totalorder 2, %s10
      // Predicated region
      $region41: #{tpu_custom_call.1} parent=5 // pred_check
        %p2083 = pneg %p2082
      $region42: #{tpu_custom_call.1} parent=5 // pred_check_branch
        %2085 = sbr.rel (%p2083) target = $region44
      $region43: #{tpu_custom_call.1} parent=5 // pred_region
        %s2086 = ssub.s32 %s10, 2
        // Predicated region
        $region45: #{tpu_custom_call.1} parent=43 // pred_check
          %p2087 = pneg %p79
        $region46: #{tpu_custom_call.1} parent=43 // pred_check_branch
          %2089 = sbr.rel (%p2087) target = $region48
        $region47: #{tpu_custom_call.1} parent=43 // pred_region
          %p2090 = scmp.lt.s32.totalorder %s21, 2
          %s2091 = scalar_select %p2090, %s21, 2
          %s2092 = smul.addr %s2091, 32
          %s2093 = smul.addr %s2092, 8
          %s2094 = scalar_lea.vmem %s1, %s2093
        $region48: #{tpu_custom_call.1} parent=43 // pred_fallthru
          _
      $region44: #{tpu_custom_call.1} parent=5 // pred_fallthru
        _
    $region6: #{tpu_custom_call.1} parent=1 // loop_footer
      %s14 = sadd.s32 1, %s10
    $region7: #{tpu_custom_call.1} parent=1 // loop_footer_branch
      %9 = sbr.rel target = $region3
    $region8: #{tpu_custom_call.1} parent=1 // loop_exit
      _
    %2095 = vsyncpa [#allocation4], 1
    %s2096 = scalar_lea.sflag [#allocation4], 1
    %2097 = vsyncpa %s2096, 1

</llo_original>
